<compile_context>
chip_gen: v7x
topology: tpu7x:2x2x1
jax: 0.10.0
libtpu: 0.0.40
codegen_flags: <defaults>
</compile_context>

<pallas_src>
import functools
import numpy as np

import jax
import jax.numpy as jnp
from jax.experimental import pallas as pl
from jax.experimental.pallas import tpu as pltpu


# ----------------------------------------------------------------------------
# Pallas kernels
# ----------------------------------------------------------------------------
def conv_bn_kernel(p_ref, w_ref, sc_ref, sh_ref, o_ref, *, relu):
    """One fused im2col matmul (taps folded into the contraction dim) + BN (+ReLU)."""
    y = jnp.dot(p_ref[...], w_ref[...], preferred_element_type=jnp.float32)
    y = y * sc_ref[...] + sh_ref[...]
    if relu:
        y = jnp.maximum(y, 0.0)
    o_ref[...] = y.astype(o_ref.dtype)


def conv_bn_add_relu_kernel(p_ref, w_ref, sc_ref, sh_ref, id_ref, o_ref):
    """Conv + BN with the residual add fused into the epilogue, then ReLU."""
    y = jnp.dot(p_ref[...], w_ref[...], preferred_element_type=jnp.float32)
    y = y * sc_ref[...] + sh_ref[...] + id_ref[...]
    o_ref[...] = jnp.maximum(y, 0.0).astype(o_ref.dtype)


def conv_bn_relu_cls_kernel(p_ref, w_ref, sc_ref, sh_ref, wc_ref, bc_ref, o_ref):
    """3x3 conv + BN + ReLU fused with the trailing 1x1 classifier conv (+bias)."""
    y = jnp.dot(p_ref[...], w_ref[...], preferred_element_type=jnp.float32)
    y = jnp.maximum(y * sc_ref[...] + sh_ref[...], 0.0)
    o_ref[...] = (jnp.dot(y, wc_ref[...], preferred_element_type=jnp.float32)
                  + bc_ref[...]).astype(o_ref.dtype)


def make_concat_conv1x1_kernel(n_in, relu):
    """1x1 conv over a conceptual channel-concat of n_in inputs (no HBM concat)."""
    def kernel(*refs):
        x_refs = refs[:n_in]
        w_refs = refs[n_in:2 * n_in]
        sc_ref, sh_ref, o_ref = refs[2 * n_in:]
        acc = jnp.dot(x_refs[0][...], w_refs[0][...],
                      preferred_element_type=jnp.float32)
        for i in range(1, n_in):
            acc = acc + jnp.dot(x_refs[i][...], w_refs[i][...],
                                preferred_element_type=jnp.float32)
        y = acc * sc_ref[...] + sh_ref[...]
        if relu:
            y = jnp.maximum(y, 0.0)
        o_ref[...] = y.astype(o_ref.dtype)
    return kernel


def maxpool_kernel(p_ref, o_ref):
    # p_ref: (K, TM, C) all taps in one block -> max over taps
    o_ref[...] = jnp.max(p_ref[...], axis=0).astype(o_ref.dtype)


def gap_kernel(x_ref, o_ref):
    # x_ref: (1, H*W, C) -> o_ref: (1, 1, C) mean over spatial positions
    o_ref[...] = jnp.mean(x_ref[...], axis=1, keepdims=True).astype(o_ref.dtype)


def bmm_left_kernel(a_ref, x_ref, o_ref):
    # a_ref: (OP, IP) kron interp matrix; x_ref: (1, IP, C); o_ref: (1, OP, C)
    o_ref[0] = jnp.dot(a_ref[...], x_ref[0],
                       preferred_element_type=jnp.float32).astype(o_ref.dtype)


def matmul_kernel(a_ref, b_ref, o_ref):
    o_ref[...] = jnp.dot(a_ref[...], b_ref[...],
                         preferred_element_type=jnp.float32).astype(o_ref.dtype)


# ----------------------------------------------------------------------------
# Glue helpers (trace-time / XLA; no compute hot path)
# ----------------------------------------------------------------------------
def _tile_rows(m, cap=1024):
    """Largest row-tile <= cap that divides m (all candidates are multiples of 8)."""
    if m <= cap:
        return m
    for t in (1024, 512, 256, 128, 64, 32, 16, 8):
        if t <= cap and m % t == 0:
            return t
    return m


def _axis_keep(k_idx, dilation, stride, out_size, pad, in_size):
    """True if this tap ever samples a non-padding position along one axis."""
    start = k_idx * dilation
    return any(pad <= start + s * stride <= pad + in_size - 1 for s in range(out_size))


def _conv_geometry(h, w, kh, kw, stride, dilation, padding):
    oh = (h + 2 * padding - dilation * (kh - 1) - 1) // stride + 1
    ow = (w + 2 * padding - dilation * (kw - 1) - 1) // stride + 1
    keep = [(ih, iw) for ih in range(kh) for iw in range(kw)
            if _axis_keep(ih, dilation, stride, oh, padding, h)
            and _axis_keep(iw, dilation, stride, ow, padding, w)]
    return oh, ow, keep


def _im2col(x, keep, stride, dilation, padding, oh, ow):
    """NHWC input -> (N*OH*OW, K_eff*Cin) bf16 buffer (taps -> contraction dim)."""
    n, _, _, c = x.shape
    xp = x
    if padding:
        xp = jnp.pad(x, ((0, 0), (padding, padding), (padding, padding), (0, 0)))
    xp = xp.astype(jnp.bfloat16)
    cols = []
    for ih, iw in keep:
        h0, w0 = ih * dilation, iw * dilation
        sl = xp[:, h0:h0 + (oh - 1) * stride + 1:stride,
                   w0:w0 + (ow - 1) * stride + 1:stride, :]
        cols.append(sl.reshape(n * oh * ow, c))
    return cols[0] if len(cols) == 1 else jnp.concatenate(cols, axis=-1)


def _weight_mat(w, keep):
    """(KH, KW, Cin, Cout) -> (K_eff*Cin, Cout) bf16, tap order matching _im2col."""
    mats = [w[ih, iw] for ih, iw in keep]
    wm = mats[0] if len(mats) == 1 else jnp.concatenate(mats, axis=0)
    return wm.astype(jnp.bfloat16)


# ----------------------------------------------------------------------------
# Pallas wrappers
# ----------------------------------------------------------------------------
def pallas_conv_bn(x, p, *, stride=1, dilation=1, padding=0, relu=True, identity=None):
    """NHWC conv + folded BN (+ReLU). If `identity` is given, residual add+ReLU is fused."""
    w, scale, shift = p["w"], p["scale"], p["shift"]
    n, h, wd, _ = x.shape
    kh, kw, _, cout = w.shape
    oh, ow, keep = _conv_geometry(h, wd, kh, kw, stride, dilation, padding)
    patches = _im2col(x, keep, stride, dilation, padding, oh, ow)
    wmat = _weight_mat(w, keep)
    m, kc = patches.shape
    tm = _tile_rows(m)
    sc = scale.reshape(1, cout).astype(jnp.float32)
    sh = shift.reshape(1, cout).astype(jnp.float32)

    in_specs = [
        pl.BlockSpec((tm, kc), lambda i: (i, 0)),
        pl.BlockSpec((kc, cout), lambda i: (0, 0)),
        pl.BlockSpec((1, cout), lambda i: (0, 0)),
        pl.BlockSpec((1, cout), lambda i: (0, 0)),
    ]
    args = [patches, wmat, sc, sh]
    if identity is None:
        kernel = functools.partial(conv_bn_kernel, relu=relu)
    else:
        kernel = conv_bn_add_relu_kernel
        in_specs.append(pl.BlockSpec((tm, cout), lambda i: (i, 0)))
        args.append(identity.reshape(m, cout).astype(jnp.float32))

    out = pl.pallas_call(
        kernel,
        grid=(m // tm,),
        in_specs=in_specs,
        out_specs=pl.BlockSpec((tm, cout), lambda i: (i, 0)),
        out_shape=jax.ShapeDtypeStruct((m, cout), jnp.float32),
        compiler_params=pltpu.CompilerParams(dimension_semantics=("parallel",)),
    )(*args)
    return out.reshape(n, oh, ow, cout)


def pallas_conv_bn_relu_cls(x, pconv, pcls, *, padding=1):
    """3x3 conv+BN+ReLU fused with the 1x1 classifier conv (+bias) in one kernel."""
    w, scale, shift = pconv["w"], pconv["scale"], pconv["shift"]
    n, h, wd, _ = x.shape
    kh, kw, _, cmid = w.shape
    oh, ow, keep = _conv_geometry(h, wd, kh, kw, 1, 1, padding)
    patches = _im2col(x, keep, 1, 1, padding, oh, ow)
    wmat = _weight_mat(w, keep)
    m, kc = patches.shape
    tm = _tile_rows(m)
    ncls = pcls["w"].shape[-1]
    wc = (pcls["w"].reshape(cmid, ncls) * pcls["scale"][None, :]).astype(jnp.float32)
    bc = pcls["shift"].reshape(1, ncls).astype(jnp.float32)

    out = pl.pallas_call(
        conv_bn_relu_cls_kernel,
        grid=(m // tm,),
        in_specs=[
            pl.BlockSpec((tm, kc), lambda i: (i, 0)),
            pl.BlockSpec((kc, cmid), lambda i: (0, 0)),
            pl.BlockSpec((1, cmid), lambda i: (0, 0)),
            pl.BlockSpec((1, cmid), lambda i: (0, 0)),
            pl.BlockSpec((cmid, ncls), lambda i: (0, 0)),
            pl.BlockSpec((1, ncls), lambda i: (0, 0)),
        ],
        out_specs=pl.BlockSpec((tm, ncls), lambda i: (i, 0)),
        out_shape=jax.ShapeDtypeStruct((m, ncls), jnp.float32),
        compiler_params=pltpu.CompilerParams(dimension_semantics=("parallel",)),
    )(patches, wmat, scale.reshape(1, cmid).astype(jnp.float32),
      shift.reshape(1, cmid).astype(jnp.float32), wc, bc)
    return out.reshape(n, oh, ow, ncls)


def pallas_concat_conv1x1_bn(xs, p, *, relu=True):
    """1x1 conv + BN (+ReLU) over a conceptual concat of `xs` along channels."""
    n, h, wd, _ = xs[0].shape
    m = n * h * wd
    cis = [int(x.shape[-1]) for x in xs]
    cout = p["w"].shape[-1]
    wfull = p["w"].reshape(sum(cis), cout)
    offs = np.cumsum([0] + cis)
    wparts = [wfull[offs[i]:offs[i + 1]].astype(jnp.bfloat16) for i in range(len(xs))]
    xflat = [x.reshape(m, ci).astype(jnp.bfloat16) for x, ci in zip(xs, cis)]
    tm = _tile_rows(m)
    sc = p["scale"].reshape(1, cout).astype(jnp.float32)
    sh = p["shift"].reshape(1, cout).astype(jnp.float32)

    in_specs = ([pl.BlockSpec((tm, ci), lambda i: (i, 0)) for ci in cis]
                + [pl.BlockSpec((ci, cout), lambda i: (0, 0)) for ci in cis]
                + [pl.BlockSpec((1, cout), lambda i: (0, 0)),
                   pl.BlockSpec((1, cout), lambda i: (0, 0))])

    out = pl.pallas_call(
        make_concat_conv1x1_kernel(len(xs), relu),
        grid=(m // tm,),
        in_specs=in_specs,
        out_specs=pl.BlockSpec((tm, cout), lambda i: (i, 0)),
        out_shape=jax.ShapeDtypeStruct((m, cout), jnp.float32),
        compiler_params=pltpu.CompilerParams(dimension_semantics=("parallel",)),
    )(*xflat, *wparts, sc, sh)
    return out.reshape(n, h, wd, cout)


def pallas_maxpool(x, ksize=3, stride=2, padding=1):
    n, h, wd, c = x.shape
    xp = jnp.pad(x, ((0, 0), (padding, padding), (padding, padding), (0, 0)),
                 constant_values=-np.inf)
    oh = (h + 2 * padding - ksize) // stride + 1
    ow = (wd + 2 * padding - ksize) // stride + 1
    slabs = []
    for ih in range(ksize):
        for iw in range(ksize):
            sl = xp[:, ih:ih + (oh - 1) * stride + 1:stride,
                       iw:iw + (ow - 1) * stride + 1:stride, :]
            slabs.append(sl.reshape(n * oh * ow, c))
    patches = jnp.stack(slabs, axis=0)            # (K, M, C)
    m = n * oh * ow
    k = ksize * ksize
    tm = _tile_rows(m)
    out = pl.pallas_call(
        maxpool_kernel,
        grid=(m // tm,),
        in_specs=[pl.BlockSpec((k, tm, c), lambda i: (0, i, 0))],
        out_specs=pl.BlockSpec((tm, c), lambda i: (i, 0)),
        out_shape=jax.ShapeDtypeStruct((m, c), x.dtype),
        compiler_params=pltpu.CompilerParams(dimension_semantics=("parallel",)),
    )(patches)
    return out.reshape(n, oh, ow, c)


def pallas_gap(x):
    """(N, H, W, C) -> (N, 1, 1, C) global average pooling."""
    n, h, w, c = x.shape
    x2 = x.reshape(n, h * w, c)
    out = pl.pallas_call(
        gap_kernel,
        grid=(n,),
        in_specs=[pl.BlockSpec((1, h * w, c), lambda i: (i, 0, 0))],
        out_specs=pl.BlockSpec((1, 1, c), lambda i: (i, 0, 0)),
        out_shape=jax.ShapeDtypeStruct((n, 1, c), x.dtype),
        compiler_params=pltpu.CompilerParams(dimension_semantics=("parallel",)),
    )(x2)
    return out.reshape(n, 1, 1, c)


# ----------------------------------------------------------------------------
# Bilinear upsample (align_corners=True) via a single kron(interp_H, interp_W) matmul
# ----------------------------------------------------------------------------
def _interp_matrix(in_size, out_size):
    a = np.zeros((out_size, in_size), np.float32)
    if in_size == 1:
        a[:, 0] = 1.0
        return a
    if out_size == 1:
        a[0, 0] = 1.0
        return a
    scale = (in_size - 1) / (out_size - 1)
    for i in range(out_size):
        src = i * scale
        lo = min(int(np.floor(src)), in_size - 2)
        frac = src - lo
        a[i, lo] += 1.0 - frac
        a[i, lo + 1] += frac
    return a


def _kron_interp(h, w, oh, ow):
    return np.kron(_interp_matrix(h, oh), _interp_matrix(w, ow))   # (oh*ow, h*w)


def upsample_bilinear_nhwc(x, oh, ow):
    """(N,H,W,C) -> (N,OH,OW,C); one kron-interp matmul per batch, no transposes."""
    n, h, w, c = x.shape
    a = jnp.asarray(_kron_interp(h, w, oh, ow))
    x2 = x.reshape(n, h * w, c)
    out = pl.pallas_call(
        bmm_left_kernel,
        grid=(n,),
        in_specs=[pl.BlockSpec((oh * ow, h * w), lambda i: (0, 0)),
                  pl.BlockSpec((1, h * w, c), lambda i: (i, 0, 0))],
        out_specs=pl.BlockSpec((1, oh * ow, c), lambda i: (i, 0, 0)),
        out_shape=jax.ShapeDtypeStruct((n, oh * ow, c), x.dtype),
        compiler_params=pltpu.CompilerParams(dimension_semantics=("parallel",)),
    )(a, x2)
    return out.reshape(n, oh, ow, c)


def upsample_bilinear_to_nchw(x, oh, ow):
    """(N,H,W,C) NHWC -> (N,C,OH,OW) NCHW; lane-dense store (OH*OW on the lane axis)."""
    n, h, w, c = x.shape
    at = jnp.asarray(_kron_interp(h, w, oh, ow).T)        # (h*w, oh*ow)
    x2 = jnp.transpose(x, (0, 3, 1, 2)).reshape(n * c, h * w)   # tiny tensor
    out = pl.pallas_call(
        matmul_kernel,
        out_shape=jax.ShapeDtypeStruct((n * c, oh * ow), x.dtype),
    )(x2, at)
    return out.reshape(n, c, oh, ow)


# ----------------------------------------------------------------------------
# Parameters (deterministic synthetic init; BN folded into scale/shift)
# ----------------------------------------------------------------------------
def _conv_bn_params(key, kh, kw, cin, cout):
    k1, k2, k3, k4, k5 = jax.random.split(key, 5)
    w = jax.random.normal(k1, (kh, kw, cin, cout), jnp.float32) / np.sqrt(kh * kw * cin)
    gamma = 1.0 + 0.1 * jax.random.normal(k2, (cout,), jnp.float32)
    beta = 0.1 * jax.random.normal(k3, (cout,), jnp.float32)
    mean = 0.05 * jax.random.normal(k4, (cout,), jnp.float32)
    var = 1.0 + 0.1 * jnp.abs(jax.random.normal(k5, (cout,), jnp.float32))
    scale = gamma / jnp.sqrt(var + 1e-5)
    shift = beta - mean * scale
    return {"w": w, "scale": scale, "shift": shift}


def _conv_bias_params(key, kh, kw, cin, cout):
    k1, k2 = jax.random.split(key, 2)
    w = jax.random.normal(k1, (kh, kw, cin, cout), jnp.float32) / np.sqrt(kh * kw * cin)
    bias = 0.01 * jax.random.normal(k2, (cout,), jnp.float32)
    return {"w": w, "scale": jnp.ones((cout,), jnp.float32), "shift": bias}


def init_params(key, num_classes=1):
    keys = iter(jax.random.split(key, 32))
    cb = lambda kh, kw, ci, co: _conv_bn_params(next(keys), kh, kw, ci, co)
    p = {}
    # mini-ResNet backbone (output stride 16, last stage dilated)
    p["stem"] = cb(7, 7, 3, 16)
    p["layer1"] = {"conv1": cb(3, 3, 16, 16), "conv2": cb(3, 3, 16, 16)}
    p["layer2"] = {"conv1": cb(3, 3, 16, 32), "conv2": cb(3, 3, 32, 32),
                   "down": cb(1, 1, 16, 32)}
    p["layer3"] = {"conv1": cb(3, 3, 32, 48), "conv2": cb(3, 3, 48, 48),
                   "down": cb(1, 1, 32, 48)}
    p["layer4"] = {"conv1": cb(3, 3, 48, 48), "conv2": cb(3, 3, 48, 48)}
    # ASPP (dilations 1, 6, 12, 18 + image pooling) and DeepLabV3+ decoder
    p["aspp"] = {"b0": cb(1, 1, 48, 32), "b1": cb(3, 3, 48, 32),
                 "b2": cb(3, 3, 48, 32), "b3": cb(3, 3, 48, 32),
                 "pool": cb(1, 1, 48, 32), "proj": cb(1, 1, 5 * 32, 32)}
    p["low_proj"] = cb(1, 1, 16, 8)
    p["ref1"] = cb(3, 3, 32 + 8, 32)
    p["ref2"] = cb(3, 3, 32, 32)
    p["cls"] = _conv_bias_params(next(keys), 1, 1, 32, num_classes)
    return p


# ----------------------------------------------------------------------------
# Model blocks
# ----------------------------------------------------------------------------
def basic_block(x, p, *, stride=1, dilation=1):
    out1 = pallas_conv_bn(x, p["conv1"], stride=stride, dilation=dilation,
                          padding=dilation, relu=True)
    if "down" in p:
        identity = pallas_conv_bn(x, p["down"], stride=stride, padding=0, relu=False)
    else:
        identity = x
    # conv2 + BN + residual add + ReLU fused into one kernel epilogue
    return pallas_conv_bn(out1, p["conv2"], stride=1, dilation=dilation,
                          padding=dilation, identity=identity)


def aspp_module(x, p):
    n, h, w, _ = x.shape
    b0 = pallas_conv_bn(x, p["b0"], padding=0, relu=True)
    b1 = pallas_conv_bn(x, p["b1"], padding=6, dilation=6, relu=True)
    b2 = pallas_conv_bn(x, p["b2"], padding=12, dilation=12, relu=True)
    b3 = pallas_conv_bn(x, p["b3"], padding=18, dilation=18, relu=True)
    pooled = pallas_gap(x)
    b4 = pallas_conv_bn(pooled, p["pool"], padding=0, relu=True)
    b4 = jnp.broadcast_to(b4, (n, h, w, b4.shape[-1]))    # bilinear on 1x1 == broadcast
    # 1x1 projection over the conceptual concat; branches fed directly (no HBM concat)
    return pallas_concat_conv1x1_bn([b0, b1, b2, b3, b4], p["proj"], relu=True)


def deeplab_aux_forward(image_nchw, params):
    """Mirrors DeepLab_Aux.forward with return_features=False:
       returns (seg_out, backbone_out, None, None)."""
    x = jnp.transpose(image_nchw, (0, 2, 3, 1))           # NCHW -> NHWC
    # backbone
    x = pallas_conv_bn(x, params["stem"], stride=2, padding=3, relu=True)
    x = pallas_maxpool(x, ksize=3, stride=2, padding=1)
    low = basic_block(x, params["layer1"], stride=1)       # low-level features
    x = basic_block(low, params["layer2"], stride=2)
    x = basic_block(x, params["layer3"], stride=2)
    high = basic_block(x, params["layer4"], stride=1, dilation=2)  # backbone_out
    # decoder (ASPP + DeepLabV3+ refinement)
    aspp_out = aspp_module(high, params["aspp"])
    up = upsample_bilinear_nhwc(aspp_out, low.shape[1], low.shape[2])
    lowp = pallas_conv_bn(low, params["low_proj"], padding=0, relu=True)
    cat = jnp.concatenate([up, lowp], axis=-1)
    y = pallas_conv_bn(cat, params["ref1"], padding=1, relu=True)
    logits = pallas_conv_bn_relu_cls(y, params["ref2"], params["cls"], padding=1)
    seg_out = upsample_bilinear_to_nchw(logits,
                                        image_nchw.shape[2], image_nchw.shape[3])
    backbone_out = jnp.transpose(high, (0, 3, 1, 2))
    return seg_out, backbone_out, None, None


# ----------------------------------------------------------------------------
# Main
# ----------------------------------------------------------------------------
if __name__ == "__main__":
    root = jax.random.PRNGKey(0)
    k_img, k_par = jax.random.split(root)
    image = jax.random.normal(k_img, (2, 3, 64, 64), jnp.float32)   # NCHW input
    params = init_params(k_par, num_classes=1)

    seg_out, backbone_out, feats, aspp = deeplab_aux_forward(image, params)
    seg_out = jax.block_until_ready(seg_out)
    backbone_out = jax.block_until_ready(backbone_out)

    assert seg_out.shape == (2, 1, 64, 64), seg_out.shape
    assert backbone_out.shape == (2, 48, 4, 4), backbone_out.shape
    assert feats is None and aspp is None
    assert bool(jnp.all(jnp.isfinite(seg_out)))
    print("KERNEL_OK")
</pallas_src>

<mosaic_0001>
module attributes {stable_mosaic.version = 11 : i64} {
  func.func @conv_bn_kernel(%arg0: i32, %arg1: memref<1024x147xbf16, #tpu.memory_space<vmem>>, %arg2: memref<147x16xbf16, #tpu.memory_space<vmem>>, %arg3: memref<1x16xf32, #tpu.memory_space<vmem>>, %arg4: memref<1x16xf32, #tpu.memory_space<vmem>>, %arg5: memref<1024x16xf32, #tpu.memory_space<vmem>>) attributes {dimension_semantics = [#tpu.dimension_semantics<parallel>], iteration_bounds = array<i64: 2>, scalar_prefetch = 0 : i64, scratch_operands = 0 : i64, tpu.core_type = #tpu.core_type<tc>, window_params = [{transform_indices = @transform_0, window_bounds = array<i64: 1024, 147>}, {pipeline_mode = #tpu.pipeline_mode<synchronous>, transform_indices = @transform_1, window_bounds = array<i64: 147, 16>}, {pipeline_mode = #tpu.pipeline_mode<synchronous>, transform_indices = @transform_2, window_bounds = array<i64: 1, 16>}, {pipeline_mode = #tpu.pipeline_mode<synchronous>, transform_indices = @transform_3, window_bounds = array<i64: 1, 16>}, {transform_indices = @transform_4, window_bounds = array<i64: 1024, 16>}]} {
    %c0 = arith.constant 0 : index
    %c0_0 = arith.constant 0 : index
    %0 = vector.load %arg1[%c0, %c0_0] : memref<1024x147xbf16, #tpu.memory_space<vmem>>, vector<1024x147xbf16>
    %c0_1 = arith.constant 0 : index
    %c0_2 = arith.constant 0 : index
    %1 = vector.load %arg2[%c0_1, %c0_2] : memref<147x16xbf16, #tpu.memory_space<vmem>>, vector<147x16xbf16>
    %cst = arith.constant dense<0.000000e+00> : vector<1024x16xf32>
    %2 = tpu.matmul %0, %1, %cst {dimension_numbers = #tpu.dot_dimension_numbers<[1], [0], [0], [1], [0, 0, 1, 1], [], []>} : vector<1024x147xbf16>, vector<147x16xbf16>, vector<1024x16xf32> -> vector<1024x16xf32>
    %c0_3 = arith.constant 0 : index
    %c0_4 = arith.constant 0 : index
    %3 = vector.load %arg3[%c0_3, %c0_4] : memref<1x16xf32, #tpu.memory_space<vmem>>, vector<1x16xf32>
    %4 = vector.broadcast %3 : vector<1x16xf32> to vector<1024x16xf32>
    %5 = arith.mulf %2, %4 : vector<1024x16xf32>
    %c0_5 = arith.constant 0 : index
    %c0_6 = arith.constant 0 : index
    %6 = vector.load %arg4[%c0_5, %c0_6] : memref<1x16xf32, #tpu.memory_space<vmem>>, vector<1x16xf32>
    %7 = vector.broadcast %6 : vector<1x16xf32> to vector<1024x16xf32>
    %8 = arith.addf %5, %7 : vector<1024x16xf32>
    %cst_7 = arith.constant 0.000000e+00 : f32
    %9 = vector.broadcast %cst_7 : f32 to vector<1024x16xf32>
    %10 = arith.maximumf %8, %9 : vector<1024x16xf32>
    %c0_8 = arith.constant 0 : index
    %c0_9 = arith.constant 0 : index
    %11 = vector.load %arg5[%c0_8, %c0_9] : memref<1024x16xf32, #tpu.memory_space<vmem>>, vector<1024x16xf32>
    tpu.vector_store %arg5[%c0_8, %c0_9], %10 {strides = array<i32>} : memref<1024x16xf32, #tpu.memory_space<vmem>>, vector<1024x16xf32>,
    return
  }
  func.func @transform_0(%arg0: i32) -> (i32, i32) {
    %c0_i32 = arith.constant 0 : i32
    %c0_i32_0 = arith.constant 0 : i32
    return %arg0, %c0_i32 : i32, i32
  }
  func.func @transform_1(%arg0: i32) -> (i32, i32) {
    %c0_i32 = arith.constant 0 : i32
    %c0_i32_0 = arith.constant 0 : i32
    %c0_i32_1 = arith.constant 0 : i32
    return %c0_i32, %c0_i32_0 : i32, i32
  }
  func.func @transform_2(%arg0: i32) -> (i32, i32) {
    %c0_i32 = arith.constant 0 : i32
    %c0_i32_0 = arith.constant 0 : i32
    %c0_i32_1 = arith.constant 0 : i32
    return %c0_i32, %c0_i32_0 : i32, i32
  }
  func.func @transform_3(%arg0: i32) -> (i32, i32) {
    %c0_i32 = arith.constant 0 : i32
    %c0_i32_0 = arith.constant 0 : i32
    %c0_i32_1 = arith.constant 0 : i32
    return %c0_i32, %c0_i32_0 : i32, i32
  }
  func.func @transform_4(%arg0: i32) -> (i32, i32) {
    %c0_i32 = arith.constant 0 : i32
    %c0_i32_0 = arith.constant 0 : i32
    return %arg0, %c0_i32 : i32, i32
  }
}

</mosaic_0001>

<llo_original>
// kernel: tpu_custom_call.1
$region0: #{tpu_custom_call.1}
  #allocation0 [shape = 'u32[]', space=smem, size = 0x4, offset = 0x4, fixed_abs, tag = 'smem constant byte address 0x4 - core index']
  #allocation1 [shape = 'u32[144,128]{1,0:T(1,128)}', space=vmem, size = 0x12000, scoped, tag = 'internal scratch']
  %s0 = inlined_call_operand.vmem [shape: bf16[2048,147], index: 0, kind: input, shape index: {}]
  %s1 = inlined_call_operand.vmem [shape: bf16[147,16], index: 1, kind: input, shape index: {}]
  %s2 = inlined_call_operand.vmem [shape: f32[1,16], index: 2, kind: input, shape index: {}]
  %s3 = inlined_call_operand.vmem [shape: f32[1,16], index: 3, kind: input, shape index: {}]
  %s4 = inlined_call_operand.vmem [shape: f32[2048,16], index: 4, kind: output, shape index: {}]
  %s5 = sld [smem:[#allocation0]]
  $region49: #{tpu_custom_call.1} parent=0
    _
  %s7 = ssub.s32 1, %s5
  %s8 = scalar_select 0, %s7, %s5
  loop: start=0, step=1, limit=4
  $region2: #{tpu_custom_call.1} parent=0 // loop_pre_header
    _
  $region3: #{tpu_custom_call.1} parent=0 // loop_header
    %s10 = sphi 0, %s14
    %p11 = scmp.ge.s32.totalorder %s10, 4
    %s20 = sphi 0, %s22
    %s23 = sphi 0, %s20
    %s24 = sphi 0, %s23
    %s40 = sphi 0, %s24
    %s44 = sphi 0, %s44
    %s46 = sphi 0, %s44
    %s47 = sphi 0, %s46
    %s61 = sphi 0, %s47
    %s65 = sphi 0, %s65
    %s67 = sphi 0, %s65
    %s68 = sphi 0, %s67
    %s82 = sphi 0, %s68
    %s86 = sphi 0, %s86
    %s88 = sphi 0, %s86
    %s89 = sphi 0, %s88
    %s103 = sphi 0, %s89
    %s109 = sphi 0, %s111
    %s112 = sphi 0, %s109
    %s113 = sphi 0, %s112
    %s129 = sphi 0, %s113
  $region4: #{tpu_custom_call.1} parent=0 // loop_header_branch
    %13 = sbr.rel (%p11) target = $region8
  $region5: #{tpu_custom_call.1} parent=0 // loop_body
    %s15 = ssub.s32 %s10, 1
    %s16 = ssub.s32 %s10, 2
    %s17 = sadd.s32 %s10, 1
    %s18 = ssub.s32 %s10, %s17
    %p19 = scmp.eq.s32.totalorder %s18, 0
    %s21 = sadd.s32 %s20, 1
    %s22 = scalar_select %p19, %s20, %s21
    %p25 = pneg %p19
    %p26 = scmp.eq.s32.totalorder %s10, 1
    %p27 = por %p25, %p26
    %p28 = scmp.ne.s32.totalorder %s20, %s23
    %p29 = scmp.eq.s32.totalorder %s10, 0
    %p30 = por %p28, %p29
    %p31 = scmp.ne.s32.totalorder %s20, %s23
    %p32 = scmp.eq.s32.totalorder %s15, 1
    %p33 = por %p31, %p32
    %p34 = scmp.ne.s32.totalorder %s23, %s24
    %p35 = scmp.eq.s32.totalorder %s15, 0
    %p36 = por %p34, %p35
    %p37 = scmp.ne.s32.totalorder %s23, %s24
    %p38 = scmp.eq.s32.totalorder %s16, 1
    %p39 = por %p37, %p38
    %p41 = scmp.ne.s32.totalorder %s24, %s40
    %p42 = scmp.eq.s32.totalorder %s16, 0
    %p43 = por %p41, %p42
    %s45 = sadd.s32 %s44, 1
    %p48 = scmp.eq.s32.totalorder %s10, 1
    %p49 = scmp.ne.s32.totalorder %s44, %s46
    %p50 = scmp.eq.s32.totalorder %s10, 0
    %p51 = por %p49, %p50
    %p52 = scmp.ne.s32.totalorder %s44, %s46
    %p53 = scmp.eq.s32.totalorder %s15, 1
    %p54 = por %p52, %p53
    %p55 = scmp.ne.s32.totalorder %s46, %s47
    %p56 = scmp.eq.s32.totalorder %s15, 0
    %p57 = por %p55, %p56
    %p58 = scmp.ne.s32.totalorder %s46, %s47
    %p59 = scmp.eq.s32.totalorder %s16, 1
    %p60 = por %p58, %p59
    %p62 = scmp.ne.s32.totalorder %s47, %s61
    %p63 = scmp.eq.s32.totalorder %s16, 0
    %p64 = por %p62, %p63
    %s66 = sadd.s32 %s65, 1
    %p69 = scmp.eq.s32.totalorder %s10, 1
    %p70 = scmp.ne.s32.totalorder %s65, %s67
    %p71 = scmp.eq.s32.totalorder %s10, 0
    %p72 = por %p70, %p71
    %p73 = scmp.ne.s32.totalorder %s65, %s67
    %p74 = scmp.eq.s32.totalorder %s15, 1
    %p75 = por %p73, %p74
    %p76 = scmp.ne.s32.totalorder %s67, %s68
    %p77 = scmp.eq.s32.totalorder %s15, 0
    %p78 = por %p76, %p77
    %p79 = scmp.ne.s32.totalorder %s67, %s68
    %p80 = scmp.eq.s32.totalorder %s16, 1
    %p81 = por %p79, %p80
    %p83 = scmp.ne.s32.totalorder %s68, %s82
    %p84 = scmp.eq.s32.totalorder %s16, 0
    %p85 = por %p83, %p84
    %s87 = sadd.s32 %s86, 1
    %p90 = scmp.eq.s32.totalorder %s10, 1
    %p91 = scmp.ne.s32.totalorder %s86, %s88
    %p92 = scmp.eq.s32.totalorder %s10, 0
    %p93 = por %p91, %p92
    %p94 = scmp.ne.s32.totalorder %s86, %s88
    %p95 = scmp.eq.s32.totalorder %s15, 1
    %p96 = por %p94, %p95
    %p97 = scmp.ne.s32.totalorder %s88, %s89
    %p98 = scmp.eq.s32.totalorder %s15, 0
    %p99 = por %p97, %p98
    %p100 = scmp.ne.s32.totalorder %s88, %s89
    %p101 = scmp.eq.s32.totalorder %s16, 1
    %p102 = por %p100, %p101
    %p104 = scmp.ne.s32.totalorder %s89, %s103
    %p105 = scmp.eq.s32.totalorder %s16, 0
    %p106 = por %p104, %p105
    %s107 = ssub.s32 %s10, %s17
    %p108 = scmp.eq.s32.totalorder %s107, 0
    %s110 = sadd.s32 %s109, 1
    %s111 = scalar_select %p108, %s109, %s110
    %p114 = pneg %p108
    %p115 = scmp.eq.s32.totalorder %s10, 1
    %p116 = por %p114, %p115
    %p117 = scmp.ne.s32.totalorder %s109, %s112
    %p118 = scmp.eq.s32.totalorder %s10, 0
    %p119 = por %p117, %p118
    %p120 = scmp.ne.s32.totalorder %s109, %s112
    %p121 = scmp.eq.s32.totalorder %s15, 1
    %p122 = por %p120, %p121
    %p123 = scmp.ne.s32.totalorder %s112, %s113
    %p124 = scmp.eq.s32.totalorder %s15, 0
    %p125 = por %p123, %p124
    %p126 = scmp.ne.s32.totalorder %s112, %s113
    %p127 = scmp.eq.s32.totalorder %s16, 1
    %p128 = por %p126, %p127
    %p130 = scmp.ne.s32.totalorder %s113, %s129
    %p131 = scmp.eq.s32.totalorder %s16, 0
    %p132 = por %p130, %p131
    %p133 = scmp.le.s32.totalorder 1, %s10
    %p134 = scmp.lt.s32.totalorder %s10, 3
    %p135 = pnand %p133, %p134
    %p136 = pneg %p135
    // Predicated region
    $region9: #{tpu_custom_call.1} parent=5 // pred_check
      _
    $region10: #{tpu_custom_call.1} parent=5 // pred_check_branch
      %138 = sbr.rel (%p135) target = $region12
    $region11: #{tpu_custom_call.1} parent=5 // pred_region
      %s139 = ssub.s32 %s10, 1
      // Predicated region
      $region13: #{tpu_custom_call.1} parent=11 // pred_check
        %p140 = pneg %p57
      $region14: #{tpu_custom_call.1} parent=11 // pred_check_branch
        %142 = sbr.rel (%p140) target = $region16
      $region15: #{tpu_custom_call.1} parent=11 // pred_region
        _
      $region16: #{tpu_custom_call.1} parent=11 // pred_fallthru
        _
      // Predicated region
      $region17: #{tpu_custom_call.1} parent=11 // pred_check
        %p143 = pneg %p78
      $region18: #{tpu_custom_call.1} parent=11 // pred_check_branch
        %145 = sbr.rel (%p143) target = $region20
      $region19: #{tpu_custom_call.1} parent=11 // pred_region
        _
      $region20: #{tpu_custom_call.1} parent=11 // pred_fallthru
        _
      // Predicated region
      $region21: #{tpu_custom_call.1} parent=11 // pred_check
        %p146 = pneg %p99
      $region22: #{tpu_custom_call.1} parent=11 // pred_check_branch
        %148 = sbr.rel (%p146) target = $region24
      $region23: #{tpu_custom_call.1} parent=11 // pred_region
        _
      $region24: #{tpu_custom_call.1} parent=11 // pred_fallthru
        _
    $region12: #{tpu_custom_call.1} parent=5 // pred_fallthru
      _
    %p149 = scmp.lt.s32.totalorder %s10, 2
    // Predicated region
    $region25: #{tpu_custom_call.1} parent=5 // pred_check
      %p150 = pneg %p149
    $region26: #{tpu_custom_call.1} parent=5 // pred_check_branch
      %152 = sbr.rel (%p150) target = $region28
    $region27: #{tpu_custom_call.1} parent=5 // pred_region
      // Predicated region
      $region29: #{tpu_custom_call.1} parent=27 // pred_check
        %p153 = pneg %p30
      $region30: #{tpu_custom_call.1} parent=27 // pred_check_branch
        %155 = sbr.rel (%p153) target = $region32
      $region31: #{tpu_custom_call.1} parent=27 // pred_region
        %s156 = smul.u32 128, %s10
        %p157 = scmp.lt.s32.totalorder %s156, 255
        %s158 = scalar_select %p157, %s156, 255
        %s159 = smul.addr %s158, 2
        %s160 = smul.addr %s159, 4
        %s161 = scalar_lea.vmem %s0, %s160
        %s162 = smul.u32 128, %s10
      $region32: #{tpu_custom_call.1} parent=27 // pred_fallthru
        _
    $region28: #{tpu_custom_call.1} parent=5 // pred_fallthru
      _
    %p163 = scmp.le.s32.totalorder 1, %s10
    %p164 = scmp.lt.s32.totalorder %s10, 3
    %p165 = pnand %p163, %p164
    %p166 = pneg %p165
    // Predicated region
    $region33: #{tpu_custom_call.1} parent=5 // pred_check
      _
    $region34: #{tpu_custom_call.1} parent=5 // pred_check_branch
      %168 = sbr.rel (%p165) target = $region36
    $region35: #{tpu_custom_call.1} parent=5 // pred_region
      %s169 = ssub.s32 %s10, 1
      %s170 = smul.u32 128, %s15
      %p171 = scmp.lt.s32.totalorder %s170, 255
      %s172 = scalar_select %p171, %s170, 255
      %s173 = smul.addr %s172, 2
      %s174 = smul.addr %s173, 4
      %s175 = scalar_lea.vmem %s0, %s174
      %p176 = pneg %p36
      %p177 = pneg %p33
      %p178 = pneg %p57
      %p179 = pneg %p54
      %p180 = pneg %p78
      %p181 = pneg %p75
      %p182 = pneg %p99
      %p183 = pneg %p96
      %p184 = pneg %p125
      %p185 = pneg %p122
      %s186 = smul.u32 128, %s15
      %p187 = scmp.lt.s32.totalorder %s186, 255
      %s188 = scalar_select %p187, %s186, 255
      %s189 = smul.addr %s188, 8
      %s190 = scalar_lea.vmem %s4, %s189
      %s191 = smul.u32 128, %s15
      %p192 = scmp.lt.s32.totalorder %s191, 255
      %s193 = scalar_select %p192, %s191, 255
      %s194 = smul.addr %s193, 2
      %s195 = smul.addr %s194, 4
      %s196 = scalar_lea.vmem %s0, %s195
      %s197 = smul.u32 128, %s15
      %s198 = smul.u32 128, %s15
      %p199 = scmp.lt.s32.totalorder %s198, 255
      %s200 = scalar_select %p199, %s198, 255
      %s201 = smul.addr %s200, 8
      %s202 = scalar_lea.vmem %s4, %s201
      %s203 = smul.u32 128, %s15
      %v205 = vld [vmem:[%s196] sm:$0xff]
      %v206 = vld [vmem:[%s196 + $0x8] sm:$0xff]
      %v207 = vld [vmem:[%s196 + $0x10] sm:$0xff]
      %v208 = vld [vmem:[%s196 + $0x18] sm:$0xff]
      %v209 = vld [vmem:[%s196 + $0x20] sm:$0xff]
      %v210 = vld [vmem:[%s196 + $0x28] sm:$0xff]
      %v211 = vld [vmem:[%s196 + $0x30] sm:$0xff]
      %v212 = vld [vmem:[%s196 + $0x38] sm:$0xff]
      %v213 = vld [vmem:[%s196 + $0x40] sm:$0xff]
      %v214 = vld [vmem:[%s196 + $0x48] sm:$0xff]
      %v215 = vld [vmem:[%s196 + $0x50] sm:$0xff]
      %v216 = vld [vmem:[%s196 + $0x58] sm:$0xff]
      %v217 = vld [vmem:[%s196 + $0x60] sm:$0xff]
      %v218 = vld [vmem:[%s196 + $0x68] sm:$0xff]
      %v219 = vld [vmem:[%s196 + $0x70] sm:$0xff]
      %v220 = vld [vmem:[%s196 + $0x78] sm:$0xff]
      %v221 = vld [vmem:[%s196 + $0x80] sm:$0xff]
      %v222 = vld [vmem:[%s196 + $0x88] sm:$0xff]
      %v223 = vld [vmem:[%s196 + $0x90] sm:$0xff]
      %v224 = vld [vmem:[%s196 + $0x98] sm:$0xff]
      %v225 = vld [vmem:[%s196 + $0xa0] sm:$0xff]
      %v226 = vld [vmem:[%s196 + $0xa8] sm:$0xff]
      %v227 = vld [vmem:[%s196 + $0xb0] sm:$0xff]
      %v228 = vld [vmem:[%s196 + $0xb8] sm:$0xff]
      %v229 = vld [vmem:[%s196 + $0xc0] sm:$0xff]
      %v230 = vld [vmem:[%s196 + $0xc8] sm:$0xff]
      %v231 = vld [vmem:[%s196 + $0xd0] sm:$0xff]
      %v232 = vld [vmem:[%s196 + $0xd8] sm:$0xff]
      %v233 = vld [vmem:[%s196 + $0xe0] sm:$0xff]
      %v234 = vld [vmem:[%s196 + $0xe8] sm:$0xff]
      %v235 = vld [vmem:[%s196 + $0xf0] sm:$0xff]
      %v236 = vld [vmem:[%s196 + $0xf8] sm:$0xff]
      %v237 = vld [vmem:[%s196 + $0x100] sm:$0xff]
      %v238 = vld [vmem:[%s196 + $0x108] sm:$0xff]
      %v239 = vld [vmem:[%s196 + $0x110] sm:$0xff]
      %v240 = vld [vmem:[%s196 + $0x118] sm:$0xff]
      %v241 = vld [vmem:[%s196 + $0x120] sm:$0xff]
      %v242 = vld [vmem:[%s196 + $0x128] sm:$0xff]
      %v243 = vld [vmem:[%s196 + $0x130] sm:$0xff]
      %v244 = vld [vmem:[%s196 + $0x138] sm:$0xff]
      %v245 = vld [vmem:[%s196 + $0x140] sm:$0xff]
      %v246 = vld [vmem:[%s196 + $0x148] sm:$0xff]
      %v247 = vld [vmem:[%s196 + $0x150] sm:$0xff]
      %v248 = vld [vmem:[%s196 + $0x158] sm:$0xff]
      %v249 = vld [vmem:[%s196 + $0x160] sm:$0xff]
      %v250 = vld [vmem:[%s196 + $0x168] sm:$0xff]
      %v251 = vld [vmem:[%s196 + $0x170] sm:$0xff]
      %v252 = vld [vmem:[%s196 + $0x178] sm:$0xff]
      %v253 = vld [vmem:[%s196 + $0x180] sm:$0xff]
      %v254 = vld [vmem:[%s196 + $0x188] sm:$0xff]
      %v255 = vld [vmem:[%s196 + $0x190] sm:$0xff]
      %v256 = vld [vmem:[%s196 + $0x198] sm:$0xff]
      %v257 = vld [vmem:[%s196 + $0x1a0] sm:$0xff]
      %v258 = vld [vmem:[%s196 + $0x1a8] sm:$0xff]
      %v259 = vld [vmem:[%s196 + $0x1b0] sm:$0xff]
      %v260 = vld [vmem:[%s196 + $0x1b8] sm:$0xff]
      %v261 = vld [vmem:[%s196 + $0x1c0] sm:$0xff]
      %v262 = vld [vmem:[%s196 + $0x1c8] sm:$0xff]
      %v263 = vld [vmem:[%s196 + $0x1d0] sm:$0xff]
      %v264 = vld [vmem:[%s196 + $0x1d8] sm:$0xff]
      %v265 = vld [vmem:[%s196 + $0x1e0] sm:$0xff]
      %v266 = vld [vmem:[%s196 + $0x1e8] sm:$0xff]
      %v267 = vld [vmem:[%s196 + $0x1f0] sm:$0xff]
      %v268 = vld [vmem:[%s196 + $0x1f8] sm:$0xff]
      %v269 = vld [vmem:[%s196 + $0x200] sm:$0xff]
      %v270 = vld [vmem:[%s196 + $0x208] sm:$0xff]
      %v271 = vld [vmem:[%s196 + $0x210] sm:$0xff]
      %v272 = vld [vmem:[%s196 + $0x218] sm:$0xff]
      %v273 = vld [vmem:[%s196 + $0x220] sm:$0xff]
      %v274 = vld [vmem:[%s196 + $0x228] sm:$0xff]
      %v275 = vld [vmem:[%s196 + $0x230] sm:$0xff]
      %v276 = vld [vmem:[%s196 + $0x238] sm:$0xff]
      %v277 = vld [vmem:[%s196 + $0x240] sm:$0xff]
      %v278 = vld [vmem:[%s196 + $0x248] sm:$0xff]
      %v279 = vld [vmem:[%s196 + $0x250] sm:$0xff]
      %v280 = vld [vmem:[%s196 + $0x258] sm:$0xff]
      %v281 = vld [vmem:[%s196 + $0x260] sm:$0xff]
      %v282 = vld [vmem:[%s196 + $0x268] sm:$0xff]
      %v283 = vld [vmem:[%s196 + $0x270] sm:$0xff]
      %v284 = vld [vmem:[%s196 + $0x278] sm:$0xff]
      %v285 = vld [vmem:[%s196 + $0x280] sm:$0xff]
      %v286 = vld [vmem:[%s196 + $0x288] sm:$0xff]
      %v287 = vld [vmem:[%s196 + $0x290] sm:$0xff]
      %v288 = vld [vmem:[%s196 + $0x298] sm:$0xff]
      %v289 = vld [vmem:[%s196 + $0x2a0] sm:$0xff]
      %v290 = vld [vmem:[%s196 + $0x2a8] sm:$0xff]
      %v291 = vld [vmem:[%s196 + $0x2b0] sm:$0xff]
      %v292 = vld [vmem:[%s196 + $0x2b8] sm:$0xff]
      %v293 = vld [vmem:[%s196 + $0x2c0] sm:$0xff]
      %v294 = vld [vmem:[%s196 + $0x2c8] sm:$0xff]
      %v295 = vld [vmem:[%s196 + $0x2d0] sm:$0xff]
      %v296 = vld [vmem:[%s196 + $0x2d8] sm:$0xff]
      %v297 = vld [vmem:[%s196 + $0x2e0] sm:$0xff]
      %v298 = vld [vmem:[%s196 + $0x2e8] sm:$0xff]
      %v299 = vld [vmem:[%s196 + $0x2f0] sm:$0xff]
      %v300 = vld [vmem:[%s196 + $0x2f8] sm:$0xff]
      %v301 = vld [vmem:[%s196 + $0x300] sm:$0xff]
      %v302 = vld [vmem:[%s196 + $0x308] sm:$0xff]
      %v303 = vld [vmem:[%s196 + $0x310] sm:$0xff]
      %v304 = vld [vmem:[%s196 + $0x318] sm:$0xff]
      %v305 = vld [vmem:[%s196 + $0x320] sm:$0xff]
      %v306 = vld [vmem:[%s196 + $0x328] sm:$0xff]
      %v307 = vld [vmem:[%s196 + $0x330] sm:$0xff]
      %v308 = vld [vmem:[%s196 + $0x338] sm:$0xff]
      %v309 = vld [vmem:[%s196 + $0x340] sm:$0xff]
      %v310 = vld [vmem:[%s196 + $0x348] sm:$0xff]
      %v311 = vld [vmem:[%s196 + $0x350] sm:$0xff]
      %v312 = vld [vmem:[%s196 + $0x358] sm:$0xff]
      %v313 = vld [vmem:[%s196 + $0x360] sm:$0xff]
      %v314 = vld [vmem:[%s196 + $0x368] sm:$0xff]
      %v315 = vld [vmem:[%s196 + $0x370] sm:$0xff]
      %v316 = vld [vmem:[%s196 + $0x378] sm:$0xff]
      %v317 = vld [vmem:[%s196 + $0x380] sm:$0xff]
      %v318 = vld [vmem:[%s196 + $0x388] sm:$0xff]
      %v319 = vld [vmem:[%s196 + $0x390] sm:$0xff]
      %v320 = vld [vmem:[%s196 + $0x398] sm:$0xff]
      %v321 = vld [vmem:[%s196 + $0x3a0] sm:$0xff]
      %v322 = vld [vmem:[%s196 + $0x3a8] sm:$0xff]
      %v323 = vld [vmem:[%s196 + $0x3b0] sm:$0xff]
      %v324 = vld [vmem:[%s196 + $0x3b8] sm:$0xff]
      %v325 = vld [vmem:[%s196 + $0x3c0] sm:$0xff]
      %v326 = vld [vmem:[%s196 + $0x3c8] sm:$0xff]
      %v327 = vld [vmem:[%s196 + $0x3d0] sm:$0xff]
      %v328 = vld [vmem:[%s196 + $0x3d8] sm:$0xff]
      %v329 = vld [vmem:[%s196 + $0x3e0] sm:$0xff]
      %v330 = vld [vmem:[%s196 + $0x3e8] sm:$0xff]
      %v331 = vld [vmem:[%s196 + $0x3f0] sm:$0xff]
      %v332 = vld [vmem:[%s196 + $0x3f8] sm:$0xff]
      %v333 = vld [vmem:[%s1] sm:$0xf]
      %v334 = vld [vmem:[%s1 + $0x4] sm:$0xf]
      %v335 = vld [vmem:[%s1 + $0x8] sm:$0xf]
      %v336 = vld [vmem:[%s1 + $0xc] sm:$0xf]
      %v337 = vld [vmem:[%s1 + $0x10] sm:$0xf]
      %v338 = vld [vmem:[%s1 + $0x14] sm:$0xf]
      %v339 = vld [vmem:[%s1 + $0x18] sm:$0xf]
      %v340 = vld [vmem:[%s1 + $0x1c] sm:$0xf]
      %v341 = vld [vmem:[%s1 + $0x20] sm:$0xf]
      %v342 = vld [vmem:[%s1 + $0x24] sm:$0xf]
      %v343 = vld [vmem:[%s1 + $0x28] sm:$0xf]
      %v344 = vld [vmem:[%s1 + $0x2c] sm:$0xf]
      %v345 = vld [vmem:[%s1 + $0x30] sm:$0xf]
      %v346 = vld [vmem:[%s1 + $0x34] sm:$0xf]
      %v347 = vld [vmem:[%s1 + $0x38] sm:$0xf]
      %v348 = vld [vmem:[%s1 + $0x3c] sm:$0xf]
      %v349 = vld [vmem:[%s1 + $0x40] sm:$0xf]
      %v350 = vld [vmem:[%s1 + $0x44] sm:$0xf]
      %v351 = vld [vmem:[%s1 + $0x48] sm:$0x3]
      %v480 = vunpack.c.l.b16 %v205
      %v481 = vunpack.c.h.b16 %v205
      %v482 = vunpack.c.l.b16 %v206
      %v483 = vunpack.c.h.b16 %v206
      %v484 = vunpack.c.l.b16 %v207
      %v485 = vunpack.c.h.b16 %v207
      %v486 = vunpack.c.l.b16 %v208
      %v487 = vunpack.c.h.b16 %v208
      %v488 = vunpack.c.l.b16 %v209
      %v489 = vunpack.c.h.b16 %v209
      %v490 = vunpack.c.l.b16 %v210
      %v491 = vunpack.c.h.b16 %v210
      %v492 = vunpack.c.l.b16 %v211
      %v493 = vunpack.c.h.b16 %v211
      %v494 = vunpack.c.l.b16 %v212
      %v495 = vunpack.c.h.b16 %v212
      %v496 = vunpack.c.l.b16 %v213
      %v497 = vunpack.c.h.b16 %v213
      %v498 = vunpack.c.l.b16 %v214
      %v499 = vunpack.c.h.b16 %v214
      %v500 = vunpack.c.l.b16 %v215
      %v501 = vunpack.c.h.b16 %v215
      %v502 = vunpack.c.l.b16 %v216
      %v503 = vunpack.c.h.b16 %v216
      %v504 = vunpack.c.l.b16 %v217
      %v505 = vunpack.c.h.b16 %v217
      %v506 = vunpack.c.l.b16 %v218
      %v507 = vunpack.c.h.b16 %v218
      %v508 = vunpack.c.l.b16 %v219
      %v509 = vunpack.c.h.b16 %v219
      %v510 = vunpack.c.l.b16 %v220
      %v511 = vunpack.c.h.b16 %v220
      %v512 = vunpack.c.l.b16 %v221
      %v513 = vunpack.c.h.b16 %v221
      %v514 = vunpack.c.l.b16 %v222
      %v515 = vunpack.c.h.b16 %v222
      %v516 = vunpack.c.l.b16 %v223
      %v517 = vunpack.c.h.b16 %v223
      %v518 = vunpack.c.l.b16 %v224
      %v519 = vunpack.c.h.b16 %v224
      %v520 = vunpack.c.l.b16 %v225
      %v521 = vunpack.c.h.b16 %v225
      %v522 = vunpack.c.l.b16 %v226
      %v523 = vunpack.c.h.b16 %v226
      %v524 = vunpack.c.l.b16 %v227
      %v525 = vunpack.c.h.b16 %v227
      %v526 = vunpack.c.l.b16 %v228
      %v527 = vunpack.c.h.b16 %v228
      %v528 = vunpack.c.l.b16 %v229
      %v529 = vunpack.c.h.b16 %v229
      %v530 = vunpack.c.l.b16 %v230
      %v531 = vunpack.c.h.b16 %v230
      %v532 = vunpack.c.l.b16 %v231
      %v533 = vunpack.c.h.b16 %v231
      %v534 = vunpack.c.l.b16 %v232
      %v535 = vunpack.c.h.b16 %v232
      %v536 = vunpack.c.l.b16 %v233
      %v537 = vunpack.c.h.b16 %v233
      %v538 = vunpack.c.l.b16 %v234
      %v539 = vunpack.c.h.b16 %v234
      %v540 = vunpack.c.l.b16 %v235
      %v541 = vunpack.c.h.b16 %v235
      %v542 = vunpack.c.l.b16 %v236
      %v543 = vunpack.c.h.b16 %v236
      %v544 = vunpack.c.l.b16 %v237
      %v545 = vunpack.c.h.b16 %v237
      %v546 = vunpack.c.l.b16 %v238
      %v547 = vunpack.c.h.b16 %v238
      %v548 = vunpack.c.l.b16 %v239
      %v549 = vunpack.c.h.b16 %v239
      %v550 = vunpack.c.l.b16 %v240
      %v551 = vunpack.c.h.b16 %v240
      %v552 = vunpack.c.l.b16 %v241
      %v553 = vunpack.c.h.b16 %v241
      %v554 = vunpack.c.l.b16 %v242
      %v555 = vunpack.c.h.b16 %v242
      %v556 = vunpack.c.l.b16 %v243
      %v557 = vunpack.c.h.b16 %v243
      %v558 = vunpack.c.l.b16 %v244
      %v559 = vunpack.c.h.b16 %v244
      %v560 = vunpack.c.l.b16 %v245
      %v561 = vunpack.c.h.b16 %v245
      %v562 = vunpack.c.l.b16 %v246
      %v563 = vunpack.c.h.b16 %v246
      %v564 = vunpack.c.l.b16 %v247
      %v565 = vunpack.c.h.b16 %v247
      %v566 = vunpack.c.l.b16 %v248
      %v567 = vunpack.c.h.b16 %v248
      %v568 = vunpack.c.l.b16 %v249
      %v569 = vunpack.c.h.b16 %v249
      %v570 = vunpack.c.l.b16 %v250
      %v571 = vunpack.c.h.b16 %v250
      %v572 = vunpack.c.l.b16 %v251
      %v573 = vunpack.c.h.b16 %v251
      %v574 = vunpack.c.l.b16 %v252
      %v575 = vunpack.c.h.b16 %v252
      %v576 = vunpack.c.l.b16 %v253
      %v577 = vunpack.c.h.b16 %v253
      %v578 = vunpack.c.l.b16 %v254
      %v579 = vunpack.c.h.b16 %v254
      %v580 = vunpack.c.l.b16 %v255
      %v581 = vunpack.c.h.b16 %v255
      %v582 = vunpack.c.l.b16 %v256
      %v583 = vunpack.c.h.b16 %v256
      %v584 = vunpack.c.l.b16 %v257
      %v585 = vunpack.c.h.b16 %v257
      %v586 = vunpack.c.l.b16 %v258
      %v587 = vunpack.c.h.b16 %v258
      %v588 = vunpack.c.l.b16 %v259
      %v589 = vunpack.c.h.b16 %v259
      %v590 = vunpack.c.l.b16 %v260
      %v591 = vunpack.c.h.b16 %v260
      %v592 = vunpack.c.l.b16 %v261
      %v593 = vunpack.c.h.b16 %v261
      %v594 = vunpack.c.l.b16 %v262
      %v595 = vunpack.c.h.b16 %v262
      %v596 = vunpack.c.l.b16 %v263
      %v597 = vunpack.c.h.b16 %v263
      %v598 = vunpack.c.l.b16 %v264
      %v599 = vunpack.c.h.b16 %v264
      %v600 = vunpack.c.l.b16 %v265
      %v601 = vunpack.c.h.b16 %v265
      %v602 = vunpack.c.l.b16 %v266
      %v603 = vunpack.c.h.b16 %v266
      %v604 = vunpack.c.l.b16 %v267
      %v605 = vunpack.c.h.b16 %v267
      %v606 = vunpack.c.l.b16 %v268
      %v607 = vunpack.c.h.b16 %v268
      %v608 = vunpack.c.l.b16 %v269
      %v609 = vunpack.c.h.b16 %v269
      %v610 = vunpack.c.l.b16 %v270
      %v611 = vunpack.c.h.b16 %v270
      %v612 = vunpack.c.l.b16 %v271
      %v613 = vunpack.c.h.b16 %v271
      %v614 = vunpack.c.l.b16 %v272
      %v615 = vunpack.c.h.b16 %v272
      %v616 = vunpack.c.l.b16 %v273
      %v617 = vunpack.c.h.b16 %v273
      %v618 = vunpack.c.l.b16 %v274
      %v619 = vunpack.c.h.b16 %v274
      %v620 = vunpack.c.l.b16 %v275
      %v621 = vunpack.c.h.b16 %v275
      %v622 = vunpack.c.l.b16 %v276
      %v623 = vunpack.c.h.b16 %v276
      %v624 = vunpack.c.l.b16 %v277
      %v625 = vunpack.c.h.b16 %v277
      %v626 = vunpack.c.l.b16 %v278
      %v627 = vunpack.c.h.b16 %v278
      %v628 = vunpack.c.l.b16 %v279
      %v629 = vunpack.c.h.b16 %v279
      %v630 = vunpack.c.l.b16 %v280
      %v631 = vunpack.c.h.b16 %v280
      %v632 = vunpack.c.l.b16 %v281
      %v633 = vunpack.c.h.b16 %v281
      %v634 = vunpack.c.l.b16 %v282
      %v635 = vunpack.c.h.b16 %v282
      %v636 = vunpack.c.l.b16 %v283
      %v637 = vunpack.c.h.b16 %v283
      %v638 = vunpack.c.l.b16 %v284
      %v639 = vunpack.c.h.b16 %v284
      %v640 = vunpack.c.l.b16 %v285
      %v641 = vunpack.c.h.b16 %v285
      %v642 = vunpack.c.l.b16 %v286
      %v643 = vunpack.c.h.b16 %v286
      %v644 = vunpack.c.l.b16 %v287
      %v645 = vunpack.c.h.b16 %v287
      %v646 = vunpack.c.l.b16 %v288
      %v647 = vunpack.c.h.b16 %v288
      %v648 = vunpack.c.l.b16 %v289
      %v649 = vunpack.c.h.b16 %v289
      %v650 = vunpack.c.l.b16 %v290
      %v651 = vunpack.c.h.b16 %v290
      %v652 = vunpack.c.l.b16 %v291
      %v653 = vunpack.c.h.b16 %v291
      %v654 = vunpack.c.l.b16 %v292
      %v655 = vunpack.c.h.b16 %v292
      %v656 = vunpack.c.l.b16 %v293
      %v657 = vunpack.c.h.b16 %v293
      %v658 = vunpack.c.l.b16 %v294
      %v659 = vunpack.c.h.b16 %v294
      %v660 = vunpack.c.l.b16 %v295
      %v661 = vunpack.c.h.b16 %v295
      %v662 = vunpack.c.l.b16 %v296
      %v663 = vunpack.c.h.b16 %v296
      %v664 = vunpack.c.l.b16 %v297
      %v665 = vunpack.c.h.b16 %v297
      %v666 = vunpack.c.l.b16 %v298
      %v667 = vunpack.c.h.b16 %v298
      %v668 = vunpack.c.l.b16 %v299
      %v669 = vunpack.c.h.b16 %v299
      %v670 = vunpack.c.l.b16 %v300
      %v671 = vunpack.c.h.b16 %v300
      %v672 = vunpack.c.l.b16 %v301
      %v673 = vunpack.c.h.b16 %v301
      %v674 = vunpack.c.l.b16 %v302
      %v675 = vunpack.c.h.b16 %v302
      %v676 = vunpack.c.l.b16 %v303
      %v677 = vunpack.c.h.b16 %v303
      %v678 = vunpack.c.l.b16 %v304
      %v679 = vunpack.c.h.b16 %v304
      %v680 = vunpack.c.l.b16 %v305
      %v681 = vunpack.c.h.b16 %v305
      %v682 = vunpack.c.l.b16 %v306
      %v683 = vunpack.c.h.b16 %v306
      %v684 = vunpack.c.l.b16 %v307
      %v685 = vunpack.c.h.b16 %v307
      %v686 = vunpack.c.l.b16 %v308
      %v687 = vunpack.c.h.b16 %v308
      %v688 = vunpack.c.l.b16 %v309
      %v689 = vunpack.c.h.b16 %v309
      %v690 = vunpack.c.l.b16 %v310
      %v691 = vunpack.c.h.b16 %v310
      %v692 = vunpack.c.l.b16 %v311
      %v693 = vunpack.c.h.b16 %v311
      %v694 = vunpack.c.l.b16 %v312
      %v695 = vunpack.c.h.b16 %v312
      %v696 = vunpack.c.l.b16 %v313
      %v697 = vunpack.c.h.b16 %v313
      %v698 = vunpack.c.l.b16 %v314
      %v699 = vunpack.c.h.b16 %v314
      %v700 = vunpack.c.l.b16 %v315
      %v701 = vunpack.c.h.b16 %v315
      %v702 = vunpack.c.l.b16 %v316
      %v703 = vunpack.c.h.b16 %v316
      %v704 = vunpack.c.l.b16 %v317
      %v705 = vunpack.c.h.b16 %v317
      %v706 = vunpack.c.l.b16 %v318
      %v707 = vunpack.c.h.b16 %v318
      %v708 = vunpack.c.l.b16 %v319
      %v709 = vunpack.c.h.b16 %v319
      %v710 = vunpack.c.l.b16 %v320
      %v711 = vunpack.c.h.b16 %v320
      %v712 = vunpack.c.l.b16 %v321
      %v713 = vunpack.c.h.b16 %v321
      %v714 = vunpack.c.l.b16 %v322
      %v715 = vunpack.c.h.b16 %v322
      %v716 = vunpack.c.l.b16 %v323
      %v717 = vunpack.c.h.b16 %v323
      %v718 = vunpack.c.l.b16 %v324
      %v719 = vunpack.c.h.b16 %v324
      %v720 = vunpack.c.l.b16 %v325
      %v721 = vunpack.c.h.b16 %v325
      %v722 = vunpack.c.l.b16 %v326
      %v723 = vunpack.c.h.b16 %v326
      %v724 = vunpack.c.l.b16 %v327
      %v725 = vunpack.c.h.b16 %v327
      %v726 = vunpack.c.l.b16 %v328
      %v727 = vunpack.c.h.b16 %v328
      %v728 = vunpack.c.l.b16 %v329
      %v729 = vunpack.c.h.b16 %v329
      %v730 = vunpack.c.l.b16 %v330
      %v731 = vunpack.c.h.b16 %v330
      %v732 = vunpack.c.l.b16 %v331
      %v733 = vunpack.c.h.b16 %v331
      %v734 = vunpack.c.l.b16 %v332
      %v735 = vunpack.c.h.b16 %v332
      %v736 = vpack.c.b16 %v482, %v480
      %v737 = vpack.c.b16 %v483, %v481
      %v738 = vpack.c.b16 %v486, %v484
      %v739 = vpack.c.b16 %v487, %v485
      %v740 = vpack.c.b16 %v490, %v488
      %v741 = vpack.c.b16 %v491, %v489
      %v742 = vpack.c.b16 %v494, %v492
      %v743 = vpack.c.b16 %v495, %v493
      %v744 = vpack.c.b16 %v498, %v496
      %v745 = vpack.c.b16 %v499, %v497
      %v746 = vpack.c.b16 %v502, %v500
      %v747 = vpack.c.b16 %v503, %v501
      %v748 = vpack.c.b16 %v506, %v504
      %v749 = vpack.c.b16 %v507, %v505
      %v750 = vpack.c.b16 %v510, %v508
      %v751 = vpack.c.b16 %v511, %v509
      %v752 = vpack.c.b16 %v514, %v512
      %v753 = vpack.c.b16 %v515, %v513
      %v754 = vpack.c.b16 %v518, %v516
      %v755 = vpack.c.b16 %v519, %v517
      %v756 = vpack.c.b16 %v522, %v520
      %v757 = vpack.c.b16 %v523, %v521
      %v758 = vpack.c.b16 %v526, %v524
      %v759 = vpack.c.b16 %v527, %v525
      %v760 = vpack.c.b16 %v530, %v528
      %v761 = vpack.c.b16 %v531, %v529
      %v762 = vpack.c.b16 %v534, %v532
      %v763 = vpack.c.b16 %v535, %v533
      %v764 = vpack.c.b16 %v538, %v536
      %v765 = vpack.c.b16 %v539, %v537
      %v766 = vpack.c.b16 %v542, %v540
      %v767 = vpack.c.b16 %v543, %v541
      %v768 = vpack.c.b16 %v546, %v544
      %v769 = vpack.c.b16 %v547, %v545
      %v770 = vpack.c.b16 %v550, %v548
      %v771 = vpack.c.b16 %v551, %v549
      %v772 = vpack.c.b16 %v554, %v552
      %v773 = vpack.c.b16 %v555, %v553
      %v774 = vpack.c.b16 %v558, %v556
      %v775 = vpack.c.b16 %v559, %v557
      %v776 = vpack.c.b16 %v562, %v560
      %v777 = vpack.c.b16 %v563, %v561
      %v778 = vpack.c.b16 %v566, %v564
      %v779 = vpack.c.b16 %v567, %v565
      %v780 = vpack.c.b16 %v570, %v568
      %v781 = vpack.c.b16 %v571, %v569
      %v782 = vpack.c.b16 %v574, %v572
      %v783 = vpack.c.b16 %v575, %v573
      %v784 = vpack.c.b16 %v578, %v576
      %v785 = vpack.c.b16 %v579, %v577
      %v786 = vpack.c.b16 %v582, %v580
      %v787 = vpack.c.b16 %v583, %v581
      %v788 = vpack.c.b16 %v586, %v584
      %v789 = vpack.c.b16 %v587, %v585
      %v790 = vpack.c.b16 %v590, %v588
      %v791 = vpack.c.b16 %v591, %v589
      %v792 = vpack.c.b16 %v594, %v592
      %v793 = vpack.c.b16 %v595, %v593
      %v794 = vpack.c.b16 %v598, %v596
      %v795 = vpack.c.b16 %v599, %v597
      %v796 = vpack.c.b16 %v602, %v600
      %v797 = vpack.c.b16 %v603, %v601
      %v798 = vpack.c.b16 %v606, %v604
      %v799 = vpack.c.b16 %v607, %v605
      %v800 = vpack.c.b16 %v610, %v608
      %v801 = vpack.c.b16 %v611, %v609
      %v802 = vpack.c.b16 %v614, %v612
      %v803 = vpack.c.b16 %v615, %v613
      %v804 = vpack.c.b16 %v618, %v616
      %v805 = vpack.c.b16 %v619, %v617
      %v806 = vpack.c.b16 %v622, %v620
      %v807 = vpack.c.b16 %v623, %v621
      %v808 = vpack.c.b16 %v626, %v624
      %v809 = vpack.c.b16 %v627, %v625
      %v810 = vpack.c.b16 %v630, %v628
      %v811 = vpack.c.b16 %v631, %v629
      %v812 = vpack.c.b16 %v634, %v632
      %v813 = vpack.c.b16 %v635, %v633
      %v814 = vpack.c.b16 %v638, %v636
      %v815 = vpack.c.b16 %v639, %v637
      %v816 = vpack.c.b16 %v642, %v640
      %v817 = vpack.c.b16 %v643, %v641
      %v818 = vpack.c.b16 %v646, %v644
      %v819 = vpack.c.b16 %v647, %v645
      %v820 = vpack.c.b16 %v650, %v648
      %v821 = vpack.c.b16 %v651, %v649
      %v822 = vpack.c.b16 %v654, %v652
      %v823 = vpack.c.b16 %v655, %v653
      %v824 = vpack.c.b16 %v658, %v656
      %v825 = vpack.c.b16 %v659, %v657
      %v826 = vpack.c.b16 %v662, %v660
      %v827 = vpack.c.b16 %v663, %v661
      %v828 = vpack.c.b16 %v666, %v664
      %v829 = vpack.c.b16 %v667, %v665
      %v830 = vpack.c.b16 %v670, %v668
      %v831 = vpack.c.b16 %v671, %v669
      %v832 = vpack.c.b16 %v674, %v672
      %v833 = vpack.c.b16 %v675, %v673
      %v834 = vpack.c.b16 %v678, %v676
      %v835 = vpack.c.b16 %v679, %v677
      %v836 = vpack.c.b16 %v682, %v680
      %v837 = vpack.c.b16 %v683, %v681
      %v838 = vpack.c.b16 %v686, %v684
      %v839 = vpack.c.b16 %v687, %v685
      %v840 = vpack.c.b16 %v690, %v688
      %v841 = vpack.c.b16 %v691, %v689
      %v842 = vpack.c.b16 %v694, %v692
      %v843 = vpack.c.b16 %v695, %v693
      %v844 = vpack.c.b16 %v698, %v696
      %v845 = vpack.c.b16 %v699, %v697
      %v846 = vpack.c.b16 %v702, %v700
      %v847 = vpack.c.b16 %v703, %v701
      %v848 = vpack.c.b16 %v706, %v704
      %v849 = vpack.c.b16 %v707, %v705
      %v850 = vpack.c.b16 %v710, %v708
      %v851 = vpack.c.b16 %v711, %v709
      %v852 = vpack.c.b16 %v714, %v712
      %v853 = vpack.c.b16 %v715, %v713
      %v854 = vpack.c.b16 %v718, %v716
      %v855 = vpack.c.b16 %v719, %v717
      %v856 = vpack.c.b16 %v722, %v720
      %v857 = vpack.c.b16 %v723, %v721
      %v858 = vpack.c.b16 %v726, %v724
      %v859 = vpack.c.b16 %v727, %v725
      %v860 = vpack.c.b16 %v730, %v728
      %v861 = vpack.c.b16 %v731, %v729
      %v862 = vpack.c.b16 %v734, %v732
      %v863 = vpack.c.b16 %v735, %v733
      %v947 = vunpack.c.l.b16 %v333
      %v948 = vunpack.c.l.b16 %v334
      %v949 = vunpack.c.l.b16 %v335
      %v950 = vunpack.c.l.b16 %v336
      %v951 = vunpack.c.l.b16 %v337
      %v952 = vunpack.c.l.b16 %v338
      %v953 = vunpack.c.l.b16 %v339
      %v954 = vunpack.c.l.b16 %v340
      %v955 = vunpack.c.l.b16 %v341
      %v956 = vunpack.c.l.b16 %v342
      %v957 = vunpack.c.l.b16 %v343
      %v958 = vunpack.c.l.b16 %v344
      %v959 = vunpack.c.l.b16 %v345
      %v960 = vunpack.c.l.b16 %v346
      %v961 = vunpack.c.l.b16 %v347
      %v962 = vunpack.c.l.b16 %v348
      %v963 = vunpack.c.l.b16 %v349
      %v964 = vunpack.c.l.b16 %v350
      %v965 = vunpack.c.l.b16 %v351
      %v966 = vpack.c.b16 %v948, %v947
      %v967 = vpack.c.b16 %v950, %v949
      %v968 = vpack.c.b16 %v952, %v951
      %v969 = vpack.c.b16 %v954, %v953
      %v970 = vpack.c.b16 %v956, %v955
      %v971 = vpack.c.b16 %v958, %v957
      %v972 = vpack.c.b16 %v960, %v959
      %v973 = vpack.c.b16 %v962, %v961
      %v974 = vpack.c.b16 %v964, %v963
      %v975 = vpack.c.b16 %v965, %v965
      %vm985 = vcmask 154624
      %v987 = vsel %vm985, %v737, 0
      %v990 = vsel %vm985, %v739, 0
      %v993 = vsel %vm985, %v741, 0
      %v996 = vsel %vm985, %v743, 0
      %v999 = vsel %vm985, %v745, 0
      %v1002 = vsel %vm985, %v747, 0
      %v1005 = vsel %vm985, %v749, 0
      %v1008 = vsel %vm985, %v751, 0
      %v1011 = vsel %vm985, %v753, 0
      %v1014 = vsel %vm985, %v755, 0
      %v1017 = vsel %vm985, %v757, 0
      %v1020 = vsel %vm985, %v759, 0
      %v1023 = vsel %vm985, %v761, 0
      %v1026 = vsel %vm985, %v763, 0
      %v1029 = vsel %vm985, %v765, 0
      %v1032 = vsel %vm985, %v767, 0
      %v1035 = vsel %vm985, %v769, 0
      %v1038 = vsel %vm985, %v771, 0
      %v1041 = vsel %vm985, %v773, 0
      %v1044 = vsel %vm985, %v775, 0
      %v1047 = vsel %vm985, %v777, 0
      %v1050 = vsel %vm985, %v779, 0
      %v1053 = vsel %vm985, %v781, 0
      %v1056 = vsel %vm985, %v783, 0
      %v1059 = vsel %vm985, %v785, 0
      %v1062 = vsel %vm985, %v787, 0
      %v1065 = vsel %vm985, %v789, 0
      %v1068 = vsel %vm985, %v791, 0
      %v1071 = vsel %vm985, %v793, 0
      %v1074 = vsel %vm985, %v795, 0
      %v1077 = vsel %vm985, %v797, 0
      %v1080 = vsel %vm985, %v799, 0
      %v1083 = vsel %vm985, %v801, 0
      %v1086 = vsel %vm985, %v803, 0
      %v1089 = vsel %vm985, %v805, 0
      %v1092 = vsel %vm985, %v807, 0
      %v1095 = vsel %vm985, %v809, 0
      %v1098 = vsel %vm985, %v811, 0
      %v1101 = vsel %vm985, %v813, 0
      %v1104 = vsel %vm985, %v815, 0
      %v1107 = vsel %vm985, %v817, 0
      %v1110 = vsel %vm985, %v819, 0
      %v1113 = vsel %vm985, %v821, 0
      %v1116 = vsel %vm985, %v823, 0
      %v1119 = vsel %vm985, %v825, 0
      %v1122 = vsel %vm985, %v827, 0
      %v1125 = vsel %vm985, %v829, 0
      %v1128 = vsel %vm985, %v831, 0
      %v1131 = vsel %vm985, %v833, 0
      %v1134 = vsel %vm985, %v835, 0
      %v1137 = vsel %vm985, %v837, 0
      %v1140 = vsel %vm985, %v839, 0
      %v1143 = vsel %vm985, %v841, 0
      %v1146 = vsel %vm985, %v843, 0
      %v1149 = vsel %vm985, %v845, 0
      %v1152 = vsel %vm985, %v847, 0
      %v1155 = vsel %vm985, %v849, 0
      %v1158 = vsel %vm985, %v851, 0
      %v1161 = vsel %vm985, %v853, 0
      %v1164 = vsel %vm985, %v855, 0
      %v1167 = vsel %vm985, %v857, 0
      %v1170 = vsel %vm985, %v859, 0
      %v1173 = vsel %vm985, %v861, 0
      %v1176 = vsel %vm985, %v863, 0
      %vm1178 = vcmask 1040384
      %vm1179 = vcmask 1041408
      %v1180 = vsel %vm1178, 4294967295, 65535
      %v1181 = vsel %vm1179, %v1180, 0
      %v1183 = vand.u32 %v975, %v1181
      %1185 = vmatprep.subr.bf16.mxu0 0
      %1186 = vmatpush1.bf16.msra.mxu0 %v966
      %1187 = vmatprep.subr.bf16.mxu0 0
      %1188 = vmatpush1.bf16.msra.mxu0 %v967
      %1189 = vmatprep.subr.bf16.mxu0 0
      %1190 = vmatpush1.bf16.msra.mxu0 %v968
      %1191 = vmatprep.subr.bf16.mxu0 0
      %1192 = vmatpush1.bf16.msra.mxu0 %v969
      %1193 = vmatprep.subr.bf16.mxu0 0
      %1194 = vmatpush1.bf16.msra.mxu0 %v970
      %1195 = vmatprep.subr.bf16.mxu0 0
      %1196 = vmatpush1.bf16.msra.mxu0 %v971
      %1197 = vmatprep.subr.bf16.mxu0 0
      %1198 = vmatpush1.bf16.msra.mxu0 %v972
      %1199 = vmatprep.subr.bf16.mxu0 0
      %1200 = vmatpush1.bf16.msra.mxu0 %v973
      %1201 = vmatprep.subr.bf16.mxu0 0
      %1202 = vmatpush1.bf16.msra.mxu0 %v974
      %1203 = vmatprep.subr.bf16.mxu0 0
      %1204 = vmatpush1.bf16.msra.mxu0 %v1183
      %1205 = vmatprep.subr.bf16.mxu0 0
      %1206 = vmatpush1.bf16.msra.mxu0 0
      %1207 = vmatprep.subr.bf16.mxu0 0
      %1208 = vmatpush1.bf16.msra.mxu0 0
      %1209 = vmatprep.subr.bf16.mxu0 0
      %1210 = vmatpush1.bf16.msra.mxu0 0
      %1211 = vmatprep.subr.bf16.mxu0 0
      %1212 = vmatpush1.bf16.msra.mxu0 0
      %1213 = vmatprep.subr.bf16.mxu0 0
      %1214 = vmatpush1.bf16.msra.mxu0 0
      %1215 = vmatprep.subr.bf16.mxu0 0
      %1216 = vmatpush1.bf16.msra.mxu0 0
      %1217 = vmatprep.mubr.bf16.mxu0 %v987
      %1218 = vmatmul.mubr.bf16.gmra.mrb[0].mxu0 %v736
      %v1219 = vpop.f32.mrb[0].mxu0
      %v1220 = vadd.f32 0.0, %v1219
      %v1221 = vpop.f32.mrb[0].mxu0
      %v1222 = vpop.f32.mrb[0].mxu0
      %v1223 = vadd.f32 0.0, %v1222
      %v1224 = vpop.f32.mrb[0].mxu0
      %1225 = vmatprep.mubr.bf16.mxu0 %v990
      %1226 = vmatmul.mubr.bf16.gmra.mrb[0].mxu0 %v738
      %v1227 = vpop.f32.mrb[0].mxu0
      %v1228 = vadd.f32 0.0, %v1227
      %v1229 = vpop.f32.mrb[0].mxu0
      %v1230 = vpop.f32.mrb[0].mxu0
      %v1231 = vadd.f32 0.0, %v1230
      %v1232 = vpop.f32.mrb[0].mxu0
      %1233 = vmatprep.mubr.bf16.mxu0 %v993
      %1234 = vmatmul.mubr.bf16.gmra.mrb[0].mxu0 %v740
      %v1235 = vpop.f32.mrb[0].mxu0
      %v1236 = vadd.f32 0.0, %v1235
      %v1237 = vpop.f32.mrb[0].mxu0
      %v1238 = vpop.f32.mrb[0].mxu0
      %v1239 = vadd.f32 0.0, %v1238
      %v1240 = vpop.f32.mrb[0].mxu0
      %1241 = vmatprep.mubr.bf16.mxu0 %v996
      %1242 = vmatmul.mubr.bf16.gmra.mrb[0].mxu0 %v742
      %v1243 = vpop.f32.mrb[0].mxu0
      %v1244 = vadd.f32 0.0, %v1243
      %v1245 = vpop.f32.mrb[0].mxu0
      %v1246 = vpop.f32.mrb[0].mxu0
      %v1247 = vadd.f32 0.0, %v1246
      %v1248 = vpop.f32.mrb[0].mxu0
      %1249 = vmatprep.mubr.bf16.mxu0 %v999
      %1250 = vmatmul.mubr.bf16.gmra.mrb[0].mxu0 %v744
      %v1251 = vpop.f32.mrb[0].mxu0
      %v1252 = vadd.f32 0.0, %v1251
      %v1253 = vpop.f32.mrb[0].mxu0
      %v1254 = vpop.f32.mrb[0].mxu0
      %v1255 = vadd.f32 0.0, %v1254
      %v1256 = vpop.f32.mrb[0].mxu0
      %1257 = vmatprep.mubr.bf16.mxu0 %v1002
      %1258 = vmatmul.mubr.bf16.gmra.mrb[0].mxu0 %v746
      %v1259 = vpop.f32.mrb[0].mxu0
      %v1260 = vadd.f32 0.0, %v1259
      %v1261 = vpop.f32.mrb[0].mxu0
      %v1262 = vpop.f32.mrb[0].mxu0
      %v1263 = vadd.f32 0.0, %v1262
      %v1264 = vpop.f32.mrb[0].mxu0
      %1265 = vmatprep.mubr.bf16.mxu0 %v1005
      %1266 = vmatmul.mubr.bf16.gmra.mrb[0].mxu0 %v748
      %v1267 = vpop.f32.mrb[0].mxu0
      %v1268 = vadd.f32 0.0, %v1267
      %v1269 = vpop.f32.mrb[0].mxu0
      %v1270 = vpop.f32.mrb[0].mxu0
      %v1271 = vadd.f32 0.0, %v1270
      %v1272 = vpop.f32.mrb[0].mxu0
      %1273 = vmatprep.mubr.bf16.mxu0 %v1008
      %1274 = vmatmul.mubr.bf16.gmra.mrb[0].mxu0 %v750
      %v1275 = vpop.f32.mrb[0].mxu0
      %v1276 = vadd.f32 0.0, %v1275
      %v1277 = vpop.f32.mrb[0].mxu0
      %v1278 = vpop.f32.mrb[0].mxu0
      %v1279 = vadd.f32 0.0, %v1278
      %v1280 = vpop.f32.mrb[0].mxu0
      %1281 = vmatprep.mubr.bf16.mxu0 %v1011
      %1282 = vmatmul.mubr.bf16.gmra.mrb[0].mxu0 %v752
      %v1283 = vpop.f32.mrb[0].mxu0
      %v1284 = vadd.f32 0.0, %v1283
      %v1285 = vpop.f32.mrb[0].mxu0
      %v1286 = vpop.f32.mrb[0].mxu0
      %v1287 = vadd.f32 0.0, %v1286
      %v1288 = vpop.f32.mrb[0].mxu0
      %1289 = vmatprep.mubr.bf16.mxu0 %v1014
      %1290 = vmatmul.mubr.bf16.gmra.mrb[0].mxu0 %v754
      %v1291 = vpop.f32.mrb[0].mxu0
      %v1292 = vadd.f32 0.0, %v1291
      %v1293 = vpop.f32.mrb[0].mxu0
      %v1294 = vpop.f32.mrb[0].mxu0
      %v1295 = vadd.f32 0.0, %v1294
      %v1296 = vpop.f32.mrb[0].mxu0
      %1297 = vmatprep.mubr.bf16.mxu0 %v1017
      %1298 = vmatmul.mubr.bf16.gmra.mrb[0].mxu0 %v756
      %v1299 = vpop.f32.mrb[0].mxu0
      %v1300 = vadd.f32 0.0, %v1299
      %v1301 = vpop.f32.mrb[0].mxu0
      %v1302 = vpop.f32.mrb[0].mxu0
      %v1303 = vadd.f32 0.0, %v1302
      %v1304 = vpop.f32.mrb[0].mxu0
      %1305 = vmatprep.mubr.bf16.mxu0 %v1020
      %1306 = vmatmul.mubr.bf16.gmra.mrb[0].mxu0 %v758
      %v1307 = vpop.f32.mrb[0].mxu0
      %v1308 = vadd.f32 0.0, %v1307
      %v1309 = vpop.f32.mrb[0].mxu0
      %v1310 = vpop.f32.mrb[0].mxu0
      %v1311 = vadd.f32 0.0, %v1310
      %v1312 = vpop.f32.mrb[0].mxu0
      %1313 = vmatprep.mubr.bf16.mxu0 %v1023
      %1314 = vmatmul.mubr.bf16.gmra.mrb[0].mxu0 %v760
      %v1315 = vpop.f32.mrb[0].mxu0
      %v1316 = vadd.f32 0.0, %v1315
      %v1317 = vpop.f32.mrb[0].mxu0
      %v1318 = vpop.f32.mrb[0].mxu0
      %v1319 = vadd.f32 0.0, %v1318
      %v1320 = vpop.f32.mrb[0].mxu0
      %1321 = vmatprep.mubr.bf16.mxu0 %v1026
      %1322 = vmatmul.mubr.bf16.gmra.mrb[0].mxu0 %v762
      %v1323 = vpop.f32.mrb[0].mxu0
      %v1324 = vadd.f32 0.0, %v1323
      %v1325 = vpop.f32.mrb[0].mxu0
      %v1326 = vpop.f32.mrb[0].mxu0
      %v1327 = vadd.f32 0.0, %v1326
      %v1328 = vpop.f32.mrb[0].mxu0
      %1329 = vmatprep.mubr.bf16.mxu0 %v1029
      %1330 = vmatmul.mubr.bf16.gmra.mrb[0].mxu0 %v764
      %v1331 = vpop.f32.mrb[0].mxu0
      %v1332 = vadd.f32 0.0, %v1331
      %v1333 = vpop.f32.mrb[0].mxu0
      %v1334 = vpop.f32.mrb[0].mxu0
      %v1335 = vadd.f32 0.0, %v1334
      %v1336 = vpop.f32.mrb[0].mxu0
      %1337 = vmatprep.mubr.bf16.mxu0 %v1032
      %1338 = vmatmul.mubr.bf16.gmra.mrb[0].mxu0 %v766
      %v1339 = vpop.f32.mrb[0].mxu0
      %v1340 = vadd.f32 0.0, %v1339
      %v1341 = vpop.f32.mrb[0].mxu0
      %v1342 = vpop.f32.mrb[0].mxu0
      %v1343 = vadd.f32 0.0, %v1342
      %v1344 = vpop.f32.mrb[0].mxu0
      %1345 = vmatprep.mubr.bf16.mxu0 %v1035
      %1346 = vmatmul.mubr.bf16.gmra.mrb[0].mxu0 %v768
      %v1347 = vpop.f32.mrb[0].mxu0
      %v1348 = vadd.f32 0.0, %v1347
      %v1349 = vpop.f32.mrb[0].mxu0
      %v1350 = vpop.f32.mrb[0].mxu0
      %v1351 = vadd.f32 0.0, %v1350
      %v1352 = vpop.f32.mrb[0].mxu0
      %1353 = vmatprep.mubr.bf16.mxu0 %v1038
      %1354 = vmatmul.mubr.bf16.gmra.mrb[0].mxu0 %v770
      %v1355 = vpop.f32.mrb[0].mxu0
      %v1356 = vadd.f32 0.0, %v1355
      %v1357 = vpop.f32.mrb[0].mxu0
      %v1358 = vpop.f32.mrb[0].mxu0
      %v1359 = vadd.f32 0.0, %v1358
      %v1360 = vpop.f32.mrb[0].mxu0
      %1361 = vmatprep.mubr.bf16.mxu0 %v1041
      %1362 = vmatmul.mubr.bf16.gmra.mrb[0].mxu0 %v772
      %v1363 = vpop.f32.mrb[0].mxu0
      %v1364 = vadd.f32 0.0, %v1363
      %v1365 = vpop.f32.mrb[0].mxu0
      %v1366 = vpop.f32.mrb[0].mxu0
      %v1367 = vadd.f32 0.0, %v1366
      %v1368 = vpop.f32.mrb[0].mxu0
      %1369 = vmatprep.mubr.bf16.mxu0 %v1044
      %1370 = vmatmul.mubr.bf16.gmra.mrb[0].mxu0 %v774
      %v1371 = vpop.f32.mrb[0].mxu0
      %v1372 = vadd.f32 0.0, %v1371
      %v1373 = vpop.f32.mrb[0].mxu0
      %v1374 = vpop.f32.mrb[0].mxu0
      %v1375 = vadd.f32 0.0, %v1374
      %v1376 = vpop.f32.mrb[0].mxu0
      %1377 = vmatprep.mubr.bf16.mxu0 %v1047
      %1378 = vmatmul.mubr.bf16.gmra.mrb[0].mxu0 %v776
      %v1379 = vpop.f32.mrb[0].mxu0
      %v1380 = vadd.f32 0.0, %v1379
      %v1381 = vpop.f32.mrb[0].mxu0
      %v1382 = vpop.f32.mrb[0].mxu0
      %v1383 = vadd.f32 0.0, %v1382
      %v1384 = vpop.f32.mrb[0].mxu0
      %1385 = vmatprep.mubr.bf16.mxu0 %v1050
      %1386 = vmatmul.mubr.bf16.gmra.mrb[0].mxu0 %v778
      %v1387 = vpop.f32.mrb[0].mxu0
      %v1388 = vadd.f32 0.0, %v1387
      %v1389 = vpop.f32.mrb[0].mxu0
      %v1390 = vpop.f32.mrb[0].mxu0
      %v1391 = vadd.f32 0.0, %v1390
      %v1392 = vpop.f32.mrb[0].mxu0
      %1393 = vmatprep.mubr.bf16.mxu0 %v1053
      %1394 = vmatmul.mubr.bf16.gmra.mrb[0].mxu0 %v780
      %v1395 = vpop.f32.mrb[0].mxu0
      %v1396 = vadd.f32 0.0, %v1395
      %v1397 = vpop.f32.mrb[0].mxu0
      %v1398 = vpop.f32.mrb[0].mxu0
      %v1399 = vadd.f32 0.0, %v1398
      %v1400 = vpop.f32.mrb[0].mxu0
      %1401 = vmatprep.mubr.bf16.mxu0 %v1056
      %1402 = vmatmul.mubr.bf16.gmra.mrb[0].mxu0 %v782
      %v1403 = vpop.f32.mrb[0].mxu0
      %v1404 = vadd.f32 0.0, %v1403
      %v1405 = vpop.f32.mrb[0].mxu0
      %v1406 = vpop.f32.mrb[0].mxu0
      %v1407 = vadd.f32 0.0, %v1406
      %v1408 = vpop.f32.mrb[0].mxu0
      %1409 = vmatprep.mubr.bf16.mxu0 %v1059
      %1410 = vmatmul.mubr.bf16.gmra.mrb[0].mxu0 %v784
      %v1411 = vpop.f32.mrb[0].mxu0
      %v1412 = vadd.f32 0.0, %v1411
      %v1413 = vpop.f32.mrb[0].mxu0
      %v1414 = vpop.f32.mrb[0].mxu0
      %v1415 = vadd.f32 0.0, %v1414
      %v1416 = vpop.f32.mrb[0].mxu0
      %1417 = vmatprep.mubr.bf16.mxu0 %v1062
      %1418 = vmatmul.mubr.bf16.gmra.mrb[0].mxu0 %v786
      %v1419 = vpop.f32.mrb[0].mxu0
      %v1420 = vadd.f32 0.0, %v1419
      %v1421 = vpop.f32.mrb[0].mxu0
      %v1422 = vpop.f32.mrb[0].mxu0
      %v1423 = vadd.f32 0.0, %v1422
      %v1424 = vpop.f32.mrb[0].mxu0
      %1425 = vmatprep.mubr.bf16.mxu0 %v1065
      %1426 = vmatmul.mubr.bf16.gmra.mrb[0].mxu0 %v788
      %v1427 = vpop.f32.mrb[0].mxu0
      %v1428 = vadd.f32 0.0, %v1427
      %v1429 = vpop.f32.mrb[0].mxu0
      %v1430 = vpop.f32.mrb[0].mxu0
      %v1431 = vadd.f32 0.0, %v1430
      %v1432 = vpop.f32.mrb[0].mxu0
      %1433 = vmatprep.mubr.bf16.mxu0 %v1068
      %1434 = vmatmul.mubr.bf16.gmra.mrb[0].mxu0 %v790
      %v1435 = vpop.f32.mrb[0].mxu0
      %v1436 = vadd.f32 0.0, %v1435
      %v1437 = vpop.f32.mrb[0].mxu0
      %v1438 = vpop.f32.mrb[0].mxu0
      %v1439 = vadd.f32 0.0, %v1438
      %v1440 = vpop.f32.mrb[0].mxu0
      %1441 = vmatprep.mubr.bf16.mxu0 %v1071
      %1442 = vmatmul.mubr.bf16.gmra.mrb[0].mxu0 %v792
      %v1443 = vpop.f32.mrb[0].mxu0
      %v1444 = vadd.f32 0.0, %v1443
      %v1445 = vpop.f32.mrb[0].mxu0
      %v1446 = vpop.f32.mrb[0].mxu0
      %v1447 = vadd.f32 0.0, %v1446
      %v1448 = vpop.f32.mrb[0].mxu0
      %1449 = vmatprep.mubr.bf16.mxu0 %v1074
      %1450 = vmatmul.mubr.bf16.gmra.mrb[0].mxu0 %v794
      %v1451 = vpop.f32.mrb[0].mxu0
      %v1452 = vadd.f32 0.0, %v1451
      %v1453 = vpop.f32.mrb[0].mxu0
      %v1454 = vpop.f32.mrb[0].mxu0
      %v1455 = vadd.f32 0.0, %v1454
      %v1456 = vpop.f32.mrb[0].mxu0
      %1457 = vmatprep.mubr.bf16.mxu0 %v1077
      %1458 = vmatmul.mubr.bf16.gmra.mrb[0].mxu0 %v796
      %v1459 = vpop.f32.mrb[0].mxu0
      %v1460 = vadd.f32 0.0, %v1459
      %v1461 = vpop.f32.mrb[0].mxu0
      %v1462 = vpop.f32.mrb[0].mxu0
      %v1463 = vadd.f32 0.0, %v1462
      %v1464 = vpop.f32.mrb[0].mxu0
      %1465 = vmatprep.mubr.bf16.mxu0 %v1080
      %1466 = vmatmul.mubr.bf16.gmra.mrb[0].mxu0 %v798
      %v1467 = vpop.f32.mrb[0].mxu0
      %v1468 = vadd.f32 0.0, %v1467
      %v1469 = vpop.f32.mrb[0].mxu0
      %v1470 = vpop.f32.mrb[0].mxu0
      %v1471 = vadd.f32 0.0, %v1470
      %v1472 = vpop.f32.mrb[0].mxu0
      %1473 = vmatprep.mubr.bf16.mxu0 %v1083
      %1474 = vmatmul.mubr.bf16.gmra.mrb[0].mxu0 %v800
      %v1475 = vpop.f32.mrb[0].mxu0
      %v1476 = vadd.f32 0.0, %v1475
      %v1477 = vpop.f32.mrb[0].mxu0
      %v1478 = vpop.f32.mrb[0].mxu0
      %v1479 = vadd.f32 0.0, %v1478
      %v1480 = vpop.f32.mrb[0].mxu0
      %1481 = vmatprep.mubr.bf16.mxu0 %v1086
      %1482 = vmatmul.mubr.bf16.gmra.mrb[0].mxu0 %v802
      %v1483 = vpop.f32.mrb[0].mxu0
      %v1484 = vadd.f32 0.0, %v1483
      %v1485 = vpop.f32.mrb[0].mxu0
      %v1486 = vpop.f32.mrb[0].mxu0
      %v1487 = vadd.f32 0.0, %v1486
      %v1488 = vpop.f32.mrb[0].mxu0
      %1489 = vmatprep.mubr.bf16.mxu0 %v1089
      %1490 = vmatmul.mubr.bf16.gmra.mrb[0].mxu0 %v804
      %v1491 = vpop.f32.mrb[0].mxu0
      %v1492 = vadd.f32 0.0, %v1491
      %v1493 = vpop.f32.mrb[0].mxu0
      %v1494 = vpop.f32.mrb[0].mxu0
      %v1495 = vadd.f32 0.0, %v1494
      %v1496 = vpop.f32.mrb[0].mxu0
      %1497 = vmatprep.mubr.bf16.mxu0 %v1092
      %1498 = vmatmul.mubr.bf16.gmra.mrb[0].mxu0 %v806
      %v1499 = vpop.f32.mrb[0].mxu0
      %v1500 = vadd.f32 0.0, %v1499
      %v1501 = vpop.f32.mrb[0].mxu0
      %v1502 = vpop.f32.mrb[0].mxu0
      %v1503 = vadd.f32 0.0, %v1502
      %v1504 = vpop.f32.mrb[0].mxu0
      %1505 = vmatprep.mubr.bf16.mxu0 %v1095
      %1506 = vmatmul.mubr.bf16.gmra.mrb[0].mxu0 %v808
      %v1507 = vpop.f32.mrb[0].mxu0
      %v1508 = vadd.f32 0.0, %v1507
      %v1509 = vpop.f32.mrb[0].mxu0
      %v1510 = vpop.f32.mrb[0].mxu0
      %v1511 = vadd.f32 0.0, %v1510
      %v1512 = vpop.f32.mrb[0].mxu0
      %1513 = vmatprep.mubr.bf16.mxu0 %v1098
      %1514 = vmatmul.mubr.bf16.gmra.mrb[0].mxu0 %v810
      %v1515 = vpop.f32.mrb[0].mxu0
      %v1516 = vadd.f32 0.0, %v1515
      %v1517 = vpop.f32.mrb[0].mxu0
      %v1518 = vpop.f32.mrb[0].mxu0
      %v1519 = vadd.f32 0.0, %v1518
      %v1520 = vpop.f32.mrb[0].mxu0
      %1521 = vmatprep.mubr.bf16.mxu0 %v1101
      %1522 = vmatmul.mubr.bf16.gmra.mrb[0].mxu0 %v812
      %v1523 = vpop.f32.mrb[0].mxu0
      %v1524 = vadd.f32 0.0, %v1523
      %v1525 = vpop.f32.mrb[0].mxu0
      %v1526 = vpop.f32.mrb[0].mxu0
      %v1527 = vadd.f32 0.0, %v1526
      %v1528 = vpop.f32.mrb[0].mxu0
      %1529 = vmatprep.mubr.bf16.mxu0 %v1104
      %1530 = vmatmul.mubr.bf16.gmra.mrb[0].mxu0 %v814
      %v1531 = vpop.f32.mrb[0].mxu0
      %v1532 = vadd.f32 0.0, %v1531
      %v1533 = vpop.f32.mrb[0].mxu0
      %v1534 = vpop.f32.mrb[0].mxu0
      %v1535 = vadd.f32 0.0, %v1534
      %v1536 = vpop.f32.mrb[0].mxu0
      %1537 = vmatprep.mubr.bf16.mxu0 %v1107
      %1538 = vmatmul.mubr.bf16.gmra.mrb[0].mxu0 %v816
      %v1539 = vpop.f32.mrb[0].mxu0
      %v1540 = vadd.f32 0.0, %v1539
      %v1541 = vpop.f32.mrb[0].mxu0
      %v1542 = vpop.f32.mrb[0].mxu0
      %v1543 = vadd.f32 0.0, %v1542
      %v1544 = vpop.f32.mrb[0].mxu0
      %1545 = vmatprep.mubr.bf16.mxu0 %v1110
      %1546 = vmatmul.mubr.bf16.gmra.mrb[0].mxu0 %v818
      %v1547 = vpop.f32.mrb[0].mxu0
      %v1548 = vadd.f32 0.0, %v1547
      %v1549 = vpop.f32.mrb[0].mxu0
      %v1550 = vpop.f32.mrb[0].mxu0
      %v1551 = vadd.f32 0.0, %v1550
      %v1552 = vpop.f32.mrb[0].mxu0
      %1553 = vmatprep.mubr.bf16.mxu0 %v1113
      %1554 = vmatmul.mubr.bf16.gmra.mrb[0].mxu0 %v820
      %v1555 = vpop.f32.mrb[0].mxu0
      %v1556 = vadd.f32 0.0, %v1555
      %v1557 = vpop.f32.mrb[0].mxu0
      %v1558 = vpop.f32.mrb[0].mxu0
      %v1559 = vadd.f32 0.0, %v1558
      %v1560 = vpop.f32.mrb[0].mxu0
      %1561 = vmatprep.mubr.bf16.mxu0 %v1116
      %1562 = vmatmul.mubr.bf16.gmra.mrb[0].mxu0 %v822
      %v1563 = vpop.f32.mrb[0].mxu0
      %v1564 = vadd.f32 0.0, %v1563
      %v1565 = vpop.f32.mrb[0].mxu0
      %v1566 = vpop.f32.mrb[0].mxu0
      %v1567 = vadd.f32 0.0, %v1566
      %v1568 = vpop.f32.mrb[0].mxu0
      %1569 = vmatprep.mubr.bf16.mxu0 %v1119
      %1570 = vmatmul.mubr.bf16.gmra.mrb[0].mxu0 %v824
      %v1571 = vpop.f32.mrb[0].mxu0
      %v1572 = vadd.f32 0.0, %v1571
      %v1573 = vpop.f32.mrb[0].mxu0
      %v1574 = vpop.f32.mrb[0].mxu0
      %v1575 = vadd.f32 0.0, %v1574
      %v1576 = vpop.f32.mrb[0].mxu0
      %1577 = vmatprep.mubr.bf16.mxu0 %v1122
      %1578 = vmatmul.mubr.bf16.gmra.mrb[0].mxu0 %v826
      %v1579 = vpop.f32.mrb[0].mxu0
      %v1580 = vadd.f32 0.0, %v1579
      %v1581 = vpop.f32.mrb[0].mxu0
      %v1582 = vpop.f32.mrb[0].mxu0
      %v1583 = vadd.f32 0.0, %v1582
      %v1584 = vpop.f32.mrb[0].mxu0
      %1585 = vmatprep.mubr.bf16.mxu0 %v1125
      %1586 = vmatmul.mubr.bf16.gmra.mrb[0].mxu0 %v828
      %v1587 = vpop.f32.mrb[0].mxu0
      %v1588 = vadd.f32 0.0, %v1587
      %v1589 = vpop.f32.mrb[0].mxu0
      %v1590 = vpop.f32.mrb[0].mxu0
      %v1591 = vadd.f32 0.0, %v1590
      %v1592 = vpop.f32.mrb[0].mxu0
      %1593 = vmatprep.mubr.bf16.mxu0 %v1128
      %1594 = vmatmul.mubr.bf16.gmra.mrb[0].mxu0 %v830
      %v1595 = vpop.f32.mrb[0].mxu0
      %v1596 = vadd.f32 0.0, %v1595
      %v1597 = vpop.f32.mrb[0].mxu0
      %v1598 = vpop.f32.mrb[0].mxu0
      %v1599 = vadd.f32 0.0, %v1598
      %v1600 = vpop.f32.mrb[0].mxu0
      %1601 = vmatprep.mubr.bf16.mxu0 %v1131
      %1602 = vmatmul.mubr.bf16.gmra.mrb[0].mxu0 %v832
      %v1603 = vpop.f32.mrb[0].mxu0
      %v1604 = vadd.f32 0.0, %v1603
      %v1605 = vpop.f32.mrb[0].mxu0
      %v1606 = vpop.f32.mrb[0].mxu0
      %v1607 = vadd.f32 0.0, %v1606
      %v1608 = vpop.f32.mrb[0].mxu0
      %1609 = vmatprep.mubr.bf16.mxu0 %v1134
      %1610 = vmatmul.mubr.bf16.gmra.mrb[0].mxu0 %v834
      %v1611 = vpop.f32.mrb[0].mxu0
      %v1612 = vadd.f32 0.0, %v1611
      %v1613 = vpop.f32.mrb[0].mxu0
      %v1614 = vpop.f32.mrb[0].mxu0
      %v1615 = vadd.f32 0.0, %v1614
      %v1616 = vpop.f32.mrb[0].mxu0
      %1617 = vmatprep.mubr.bf16.mxu0 %v1137
      %1618 = vmatmul.mubr.bf16.gmra.mrb[0].mxu0 %v836
      %v1619 = vpop.f32.mrb[0].mxu0
      %v1620 = vadd.f32 0.0, %v1619
      %v1621 = vpop.f32.mrb[0].mxu0
      %v1622 = vpop.f32.mrb[0].mxu0
      %v1623 = vadd.f32 0.0, %v1622
      %v1624 = vpop.f32.mrb[0].mxu0
      %1625 = vmatprep.mubr.bf16.mxu0 %v1140
      %1626 = vmatmul.mubr.bf16.gmra.mrb[0].mxu0 %v838
      %v1627 = vpop.f32.mrb[0].mxu0
      %v1628 = vadd.f32 0.0, %v1627
      %v1629 = vpop.f32.mrb[0].mxu0
      %v1630 = vpop.f32.mrb[0].mxu0
      %v1631 = vadd.f32 0.0, %v1630
      %v1632 = vpop.f32.mrb[0].mxu0
      %1633 = vmatprep.mubr.bf16.mxu0 %v1143
      %1634 = vmatmul.mubr.bf16.gmra.mrb[0].mxu0 %v840
      %v1635 = vpop.f32.mrb[0].mxu0
      %v1636 = vadd.f32 0.0, %v1635
      %v1637 = vpop.f32.mrb[0].mxu0
      %v1638 = vpop.f32.mrb[0].mxu0
      %v1639 = vadd.f32 0.0, %v1638
      %v1640 = vpop.f32.mrb[0].mxu0
      %1641 = vmatprep.mubr.bf16.mxu0 %v1146
      %1642 = vmatmul.mubr.bf16.gmra.mrb[0].mxu0 %v842
      %v1643 = vpop.f32.mrb[0].mxu0
      %v1644 = vadd.f32 0.0, %v1643
      %v1645 = vpop.f32.mrb[0].mxu0
      %v1646 = vpop.f32.mrb[0].mxu0
      %v1647 = vadd.f32 0.0, %v1646
      %v1648 = vpop.f32.mrb[0].mxu0
      %1649 = vmatprep.mubr.bf16.mxu0 %v1149
      %1650 = vmatmul.mubr.bf16.gmra.mrb[0].mxu0 %v844
      %v1651 = vpop.f32.mrb[0].mxu0
      %v1652 = vadd.f32 0.0, %v1651
      %v1653 = vpop.f32.mrb[0].mxu0
      %v1654 = vpop.f32.mrb[0].mxu0
      %v1655 = vadd.f32 0.0, %v1654
      %v1656 = vpop.f32.mrb[0].mxu0
      %1657 = vmatprep.mubr.bf16.mxu0 %v1152
      %1658 = vmatmul.mubr.bf16.gmra.mrb[0].mxu0 %v846
      %v1659 = vpop.f32.mrb[0].mxu0
      %v1660 = vadd.f32 0.0, %v1659
      %v1661 = vpop.f32.mrb[0].mxu0
      %v1662 = vpop.f32.mrb[0].mxu0
      %v1663 = vadd.f32 0.0, %v1662
      %v1664 = vpop.f32.mrb[0].mxu0
      %1665 = vmatprep.mubr.bf16.mxu0 %v1155
      %1666 = vmatmul.mubr.bf16.gmra.mrb[0].mxu0 %v848
      %v1667 = vpop.f32.mrb[0].mxu0
      %v1668 = vadd.f32 0.0, %v1667
      %v1669 = vpop.f32.mrb[0].mxu0
      %v1670 = vpop.f32.mrb[0].mxu0
      %v1671 = vadd.f32 0.0, %v1670
      %v1672 = vpop.f32.mrb[0].mxu0
      %1673 = vmatprep.mubr.bf16.mxu0 %v1158
      %1674 = vmatmul.mubr.bf16.gmra.mrb[0].mxu0 %v850
      %v1675 = vpop.f32.mrb[0].mxu0
      %v1676 = vadd.f32 0.0, %v1675
      %v1677 = vpop.f32.mrb[0].mxu0
      %v1678 = vpop.f32.mrb[0].mxu0
      %v1679 = vadd.f32 0.0, %v1678
      %v1680 = vpop.f32.mrb[0].mxu0
      %1681 = vmatprep.mubr.bf16.mxu0 %v1161
      %1682 = vmatmul.mubr.bf16.gmra.mrb[0].mxu0 %v852
      %v1683 = vpop.f32.mrb[0].mxu0
      %v1684 = vadd.f32 0.0, %v1683
      %v1685 = vpop.f32.mrb[0].mxu0
      %v1686 = vpop.f32.mrb[0].mxu0
      %v1687 = vadd.f32 0.0, %v1686
      %v1688 = vpop.f32.mrb[0].mxu0
      %1689 = vmatprep.mubr.bf16.mxu0 %v1164
      %1690 = vmatmul.mubr.bf16.gmra.mrb[0].mxu0 %v854
      %v1691 = vpop.f32.mrb[0].mxu0
      %v1692 = vadd.f32 0.0, %v1691
      %v1693 = vpop.f32.mrb[0].mxu0
      %v1694 = vpop.f32.mrb[0].mxu0
      %v1695 = vadd.f32 0.0, %v1694
      %v1696 = vpop.f32.mrb[0].mxu0
      %1697 = vmatprep.mubr.bf16.mxu0 %v1167
      %1698 = vmatmul.mubr.bf16.gmra.mrb[0].mxu0 %v856
      %v1699 = vpop.f32.mrb[0].mxu0
      %v1700 = vadd.f32 0.0, %v1699
      %v1701 = vpop.f32.mrb[0].mxu0
      %v1702 = vpop.f32.mrb[0].mxu0
      %v1703 = vadd.f32 0.0, %v1702
      %v1704 = vpop.f32.mrb[0].mxu0
      %1705 = vmatprep.mubr.bf16.mxu0 %v1170
      %1706 = vmatmul.mubr.bf16.gmra.mrb[0].mxu0 %v858
      %v1707 = vpop.f32.mrb[0].mxu0
      %v1708 = vadd.f32 0.0, %v1707
      %v1709 = vpop.f32.mrb[0].mxu0
      %v1710 = vpop.f32.mrb[0].mxu0
      %v1711 = vadd.f32 0.0, %v1710
      %v1712 = vpop.f32.mrb[0].mxu0
      %1713 = vmatprep.mubr.bf16.mxu0 %v1173
      %1714 = vmatmul.mubr.bf16.gmra.mrb[0].mxu0 %v860
      %v1715 = vpop.f32.mrb[0].mxu0
      %v1716 = vadd.f32 0.0, %v1715
      %v1717 = vpop.f32.mrb[0].mxu0
      %v1718 = vpop.f32.mrb[0].mxu0
      %v1719 = vadd.f32 0.0, %v1718
      %v1720 = vpop.f32.mrb[0].mxu0
      %1721 = vmatprep.mubr.bf16.mxu0 %v1176
      %1722 = vmatmul.mubr.bf16.gmra.mrb[0].mxu0 %v862
      %v1723 = vpop.f32.mrb[0].mxu0
      %v1724 = vadd.f32 0.0, %v1723
      %v1725 = vpop.f32.mrb[0].mxu0
      %v1726 = vpop.f32.mrb[0].mxu0
      %v1727 = vadd.f32 0.0, %v1726
      %v1728 = vpop.f32.mrb[0].mxu0
      %1729 = vdwg.mxu0
      %v1730 = vld [vmem:[%s2] sm:$0x1]
      %v1732 = vlaneseq
      %v1733 = vshrl.u32 %v1732, 7
      %v1734 = vsub.s32 0, %v1733
      %v1735 = vrot.slane %v1730, %v1734
      %v1737 = vmul.f32 %v1220, %v1735
      %v1738 = vmul.f32 %v1223, %v1735
      %v1739 = vmul.f32 %v1228, %v1735
      %v1740 = vmul.f32 %v1231, %v1735
      %v1741 = vmul.f32 %v1236, %v1735
      %v1742 = vmul.f32 %v1239, %v1735
      %v1743 = vmul.f32 %v1244, %v1735
      %v1744 = vmul.f32 %v1247, %v1735
      %v1745 = vmul.f32 %v1252, %v1735
      %v1746 = vmul.f32 %v1255, %v1735
      %v1747 = vmul.f32 %v1260, %v1735
      %v1748 = vmul.f32 %v1263, %v1735
      %v1749 = vmul.f32 %v1268, %v1735
      %v1750 = vmul.f32 %v1271, %v1735
      %v1751 = vmul.f32 %v1276, %v1735
      %v1752 = vmul.f32 %v1279, %v1735
      %v1753 = vmul.f32 %v1284, %v1735
      %v1754 = vmul.f32 %v1287, %v1735
      %v1755 = vmul.f32 %v1292, %v1735
      %v1756 = vmul.f32 %v1295, %v1735
      %v1757 = vmul.f32 %v1300, %v1735
      %v1758 = vmul.f32 %v1303, %v1735
      %v1759 = vmul.f32 %v1308, %v1735
      %v1760 = vmul.f32 %v1311, %v1735
      %v1761 = vmul.f32 %v1316, %v1735
      %v1762 = vmul.f32 %v1319, %v1735
      %v1763 = vmul.f32 %v1324, %v1735
      %v1764 = vmul.f32 %v1327, %v1735
      %v1765 = vmul.f32 %v1332, %v1735
      %v1766 = vmul.f32 %v1335, %v1735
      %v1767 = vmul.f32 %v1340, %v1735
      %v1768 = vmul.f32 %v1343, %v1735
      %v1769 = vmul.f32 %v1348, %v1735
      %v1770 = vmul.f32 %v1351, %v1735
      %v1771 = vmul.f32 %v1356, %v1735
      %v1772 = vmul.f32 %v1359, %v1735
      %v1773 = vmul.f32 %v1364, %v1735
      %v1774 = vmul.f32 %v1367, %v1735
      %v1775 = vmul.f32 %v1372, %v1735
      %v1776 = vmul.f32 %v1375, %v1735
      %v1777 = vmul.f32 %v1380, %v1735
      %v1778 = vmul.f32 %v1383, %v1735
      %v1779 = vmul.f32 %v1388, %v1735
      %v1780 = vmul.f32 %v1391, %v1735
      %v1781 = vmul.f32 %v1396, %v1735
      %v1782 = vmul.f32 %v1399, %v1735
      %v1783 = vmul.f32 %v1404, %v1735
      %v1784 = vmul.f32 %v1407, %v1735
      %v1785 = vmul.f32 %v1412, %v1735
      %v1786 = vmul.f32 %v1415, %v1735
      %v1787 = vmul.f32 %v1420, %v1735
      %v1788 = vmul.f32 %v1423, %v1735
      %v1789 = vmul.f32 %v1428, %v1735
      %v1790 = vmul.f32 %v1431, %v1735
      %v1791 = vmul.f32 %v1436, %v1735
      %v1792 = vmul.f32 %v1439, %v1735
      %v1793 = vmul.f32 %v1444, %v1735
      %v1794 = vmul.f32 %v1447, %v1735
      %v1795 = vmul.f32 %v1452, %v1735
      %v1796 = vmul.f32 %v1455, %v1735
      %v1797 = vmul.f32 %v1460, %v1735
      %v1798 = vmul.f32 %v1463, %v1735
      %v1799 = vmul.f32 %v1468, %v1735
      %v1800 = vmul.f32 %v1471, %v1735
      %v1801 = vmul.f32 %v1476, %v1735
      %v1802 = vmul.f32 %v1479, %v1735
      %v1803 = vmul.f32 %v1484, %v1735
      %v1804 = vmul.f32 %v1487, %v1735
      %v1805 = vmul.f32 %v1492, %v1735
      %v1806 = vmul.f32 %v1495, %v1735
      %v1807 = vmul.f32 %v1500, %v1735
      %v1808 = vmul.f32 %v1503, %v1735
      %v1809 = vmul.f32 %v1508, %v1735
      %v1810 = vmul.f32 %v1511, %v1735
      %v1811 = vmul.f32 %v1516, %v1735
      %v1812 = vmul.f32 %v1519, %v1735
      %v1813 = vmul.f32 %v1524, %v1735
      %v1814 = vmul.f32 %v1527, %v1735
      %v1815 = vmul.f32 %v1532, %v1735
      %v1816 = vmul.f32 %v1535, %v1735
      %v1817 = vmul.f32 %v1540, %v1735
      %v1818 = vmul.f32 %v1543, %v1735
      %v1819 = vmul.f32 %v1548, %v1735
      %v1820 = vmul.f32 %v1551, %v1735
      %v1821 = vmul.f32 %v1556, %v1735
      %v1822 = vmul.f32 %v1559, %v1735
      %v1823 = vmul.f32 %v1564, %v1735
      %v1824 = vmul.f32 %v1567, %v1735
      %v1825 = vmul.f32 %v1572, %v1735
      %v1826 = vmul.f32 %v1575, %v1735
      %v1827 = vmul.f32 %v1580, %v1735
      %v1828 = vmul.f32 %v1583, %v1735
      %v1829 = vmul.f32 %v1588, %v1735
      %v1830 = vmul.f32 %v1591, %v1735
      %v1831 = vmul.f32 %v1596, %v1735
      %v1832 = vmul.f32 %v1599, %v1735
      %v1833 = vmul.f32 %v1604, %v1735
      %v1834 = vmul.f32 %v1607, %v1735
      %v1835 = vmul.f32 %v1612, %v1735
      %v1836 = vmul.f32 %v1615, %v1735
      %v1837 = vmul.f32 %v1620, %v1735
      %v1838 = vmul.f32 %v1623, %v1735
      %v1839 = vmul.f32 %v1628, %v1735
      %v1840 = vmul.f32 %v1631, %v1735
      %v1841 = vmul.f32 %v1636, %v1735
      %v1842 = vmul.f32 %v1639, %v1735
      %v1843 = vmul.f32 %v1644, %v1735
      %v1844 = vmul.f32 %v1647, %v1735
      %v1845 = vmul.f32 %v1652, %v1735
      %v1846 = vmul.f32 %v1655, %v1735
      %v1847 = vmul.f32 %v1660, %v1735
      %v1848 = vmul.f32 %v1663, %v1735
      %v1849 = vmul.f32 %v1668, %v1735
      %v1850 = vmul.f32 %v1671, %v1735
      %v1851 = vmul.f32 %v1676, %v1735
      %v1852 = vmul.f32 %v1679, %v1735
      %v1853 = vmul.f32 %v1684, %v1735
      %v1854 = vmul.f32 %v1687, %v1735
      %v1855 = vmul.f32 %v1692, %v1735
      %v1856 = vmul.f32 %v1695, %v1735
      %v1857 = vmul.f32 %v1700, %v1735
      %v1858 = vmul.f32 %v1703, %v1735
      %v1859 = vmul.f32 %v1708, %v1735
      %v1860 = vmul.f32 %v1711, %v1735
      %v1861 = vmul.f32 %v1716, %v1735
      %v1862 = vmul.f32 %v1719, %v1735
      %v1863 = vmul.f32 %v1724, %v1735
      %v1864 = vmul.f32 %v1727, %v1735
      %v1865 = vld [vmem:[%s3] sm:$0x1]
      %v1867 = vlaneseq
      %v1868 = vshrl.u32 %v1867, 7
      %v1869 = vsub.s32 0, %v1868
      %v1870 = vrot.slane %v1865, %v1869
      %v1872 = vadd.f32 %v1737, %v1870
      %v1873 = vadd.f32 %v1738, %v1870
      %v1874 = vadd.f32 %v1739, %v1870
      %v1875 = vadd.f32 %v1740, %v1870
      %v1876 = vadd.f32 %v1741, %v1870
      %v1877 = vadd.f32 %v1742, %v1870
      %v1878 = vadd.f32 %v1743, %v1870
      %v1879 = vadd.f32 %v1744, %v1870
      %v1880 = vadd.f32 %v1745, %v1870
      %v1881 = vadd.f32 %v1746, %v1870
      %v1882 = vadd.f32 %v1747, %v1870
      %v1883 = vadd.f32 %v1748, %v1870
      %v1884 = vadd.f32 %v1749, %v1870
      %v1885 = vadd.f32 %v1750, %v1870
      %v1886 = vadd.f32 %v1751, %v1870
      %v1887 = vadd.f32 %v1752, %v1870
      %v1888 = vadd.f32 %v1753, %v1870
      %v1889 = vadd.f32 %v1754, %v1870
      %v1890 = vadd.f32 %v1755, %v1870
      %v1891 = vadd.f32 %v1756, %v1870
      %v1892 = vadd.f32 %v1757, %v1870
      %v1893 = vadd.f32 %v1758, %v1870
      %v1894 = vadd.f32 %v1759, %v1870
      %v1895 = vadd.f32 %v1760, %v1870
      %v1896 = vadd.f32 %v1761, %v1870
      %v1897 = vadd.f32 %v1762, %v1870
      %v1898 = vadd.f32 %v1763, %v1870
      %v1899 = vadd.f32 %v1764, %v1870
      %v1900 = vadd.f32 %v1765, %v1870
      %v1901 = vadd.f32 %v1766, %v1870
      %v1902 = vadd.f32 %v1767, %v1870
      %v1903 = vadd.f32 %v1768, %v1870
      %v1904 = vadd.f32 %v1769, %v1870
      %v1905 = vadd.f32 %v1770, %v1870
      %v1906 = vadd.f32 %v1771, %v1870
      %v1907 = vadd.f32 %v1772, %v1870
      %v1908 = vadd.f32 %v1773, %v1870
      %v1909 = vadd.f32 %v1774, %v1870
      %v1910 = vadd.f32 %v1775, %v1870
      %v1911 = vadd.f32 %v1776, %v1870
      %v1912 = vadd.f32 %v1777, %v1870
      %v1913 = vadd.f32 %v1778, %v1870
      %v1914 = vadd.f32 %v1779, %v1870
      %v1915 = vadd.f32 %v1780, %v1870
      %v1916 = vadd.f32 %v1781, %v1870
      %v1917 = vadd.f32 %v1782, %v1870
      %v1918 = vadd.f32 %v1783, %v1870
      %v1919 = vadd.f32 %v1784, %v1870
      %v1920 = vadd.f32 %v1785, %v1870
      %v1921 = vadd.f32 %v1786, %v1870
      %v1922 = vadd.f32 %v1787, %v1870
      %v1923 = vadd.f32 %v1788, %v1870
      %v1924 = vadd.f32 %v1789, %v1870
      %v1925 = vadd.f32 %v1790, %v1870
      %v1926 = vadd.f32 %v1791, %v1870
      %v1927 = vadd.f32 %v1792, %v1870
      %v1928 = vadd.f32 %v1793, %v1870
      %v1929 = vadd.f32 %v1794, %v1870
      %v1930 = vadd.f32 %v1795, %v1870
      %v1931 = vadd.f32 %v1796, %v1870
      %v1932 = vadd.f32 %v1797, %v1870
      %v1933 = vadd.f32 %v1798, %v1870
      %v1934 = vadd.f32 %v1799, %v1870
      %v1935 = vadd.f32 %v1800, %v1870
      %v1936 = vadd.f32 %v1801, %v1870
      %v1937 = vadd.f32 %v1802, %v1870
      %v1938 = vadd.f32 %v1803, %v1870
      %v1939 = vadd.f32 %v1804, %v1870
      %v1940 = vadd.f32 %v1805, %v1870
      %v1941 = vadd.f32 %v1806, %v1870
      %v1942 = vadd.f32 %v1807, %v1870
      %v1943 = vadd.f32 %v1808, %v1870
      %v1944 = vadd.f32 %v1809, %v1870
      %v1945 = vadd.f32 %v1810, %v1870
      %v1946 = vadd.f32 %v1811, %v1870
      %v1947 = vadd.f32 %v1812, %v1870
      %v1948 = vadd.f32 %v1813, %v1870
      %v1949 = vadd.f32 %v1814, %v1870
      %v1950 = vadd.f32 %v1815, %v1870
      %v1951 = vadd.f32 %v1816, %v1870
      %v1952 = vadd.f32 %v1817, %v1870
      %v1953 = vadd.f32 %v1818, %v1870
      %v1954 = vadd.f32 %v1819, %v1870
      %v1955 = vadd.f32 %v1820, %v1870
      %v1956 = vadd.f32 %v1821, %v1870
      %v1957 = vadd.f32 %v1822, %v1870
      %v1958 = vadd.f32 %v1823, %v1870
      %v1959 = vadd.f32 %v1824, %v1870
      %v1960 = vadd.f32 %v1825, %v1870
      %v1961 = vadd.f32 %v1826, %v1870
      %v1962 = vadd.f32 %v1827, %v1870
      %v1963 = vadd.f32 %v1828, %v1870
      %v1964 = vadd.f32 %v1829, %v1870
      %v1965 = vadd.f32 %v1830, %v1870
      %v1966 = vadd.f32 %v1831, %v1870
      %v1967 = vadd.f32 %v1832, %v1870
      %v1968 = vadd.f32 %v1833, %v1870
      %v1969 = vadd.f32 %v1834, %v1870
      %v1970 = vadd.f32 %v1835, %v1870
      %v1971 = vadd.f32 %v1836, %v1870
      %v1972 = vadd.f32 %v1837, %v1870
      %v1973 = vadd.f32 %v1838, %v1870
      %v1974 = vadd.f32 %v1839, %v1870
      %v1975 = vadd.f32 %v1840, %v1870
      %v1976 = vadd.f32 %v1841, %v1870
      %v1977 = vadd.f32 %v1842, %v1870
      %v1978 = vadd.f32 %v1843, %v1870
      %v1979 = vadd.f32 %v1844, %v1870
      %v1980 = vadd.f32 %v1845, %v1870
      %v1981 = vadd.f32 %v1846, %v1870
      %v1982 = vadd.f32 %v1847, %v1870
      %v1983 = vadd.f32 %v1848, %v1870
      %v1984 = vadd.f32 %v1849, %v1870
      %v1985 = vadd.f32 %v1850, %v1870
      %v1986 = vadd.f32 %v1851, %v1870
      %v1987 = vadd.f32 %v1852, %v1870
      %v1988 = vadd.f32 %v1853, %v1870
      %v1989 = vadd.f32 %v1854, %v1870
      %v1990 = vadd.f32 %v1855, %v1870
      %v1991 = vadd.f32 %v1856, %v1870
      %v1992 = vadd.f32 %v1857, %v1870
      %v1993 = vadd.f32 %v1858, %v1870
      %v1994 = vadd.f32 %v1859, %v1870
      %v1995 = vadd.f32 %v1860, %v1870
      %v1996 = vadd.f32 %v1861, %v1870
      %v1997 = vadd.f32 %v1862, %v1870
      %v1998 = vadd.f32 %v1863, %v1870
      %v1999 = vadd.f32 %v1864, %v1870
      %v2000 = vmax.f32 %v1872, 0.0
      %v2001 = vmax.f32 %v1873, 0.0
      %v2002 = vmax.f32 %v1874, 0.0
      %v2003 = vmax.f32 %v1875, 0.0
      %v2004 = vmax.f32 %v1876, 0.0
      %v2005 = vmax.f32 %v1877, 0.0
      %v2006 = vmax.f32 %v1878, 0.0
      %v2007 = vmax.f32 %v1879, 0.0
      %v2008 = vmax.f32 %v1880, 0.0
      %v2009 = vmax.f32 %v1881, 0.0
      %v2010 = vmax.f32 %v1882, 0.0
      %v2011 = vmax.f32 %v1883, 0.0
      %v2012 = vmax.f32 %v1884, 0.0
      %v2013 = vmax.f32 %v1885, 0.0
      %v2014 = vmax.f32 %v1886, 0.0
      %v2015 = vmax.f32 %v1887, 0.0
      %v2016 = vmax.f32 %v1888, 0.0
      %v2017 = vmax.f32 %v1889, 0.0
      %v2018 = vmax.f32 %v1890, 0.0
      %v2019 = vmax.f32 %v1891, 0.0
      %v2020 = vmax.f32 %v1892, 0.0
      %v2021 = vmax.f32 %v1893, 0.0
      %v2022 = vmax.f32 %v1894, 0.0
      %v2023 = vmax.f32 %v1895, 0.0
      %v2024 = vmax.f32 %v1896, 0.0
      %v2025 = vmax.f32 %v1897, 0.0
      %v2026 = vmax.f32 %v1898, 0.0
      %v2027 = vmax.f32 %v1899, 0.0
      %v2028 = vmax.f32 %v1900, 0.0
      %v2029 = vmax.f32 %v1901, 0.0
      %v2030 = vmax.f32 %v1902, 0.0
      %v2031 = vmax.f32 %v1903, 0.0
      %v2032 = vmax.f32 %v1904, 0.0
      %v2033 = vmax.f32 %v1905, 0.0
      %v2034 = vmax.f32 %v1906, 0.0
      %v2035 = vmax.f32 %v1907, 0.0
      %v2036 = vmax.f32 %v1908, 0.0
      %v2037 = vmax.f32 %v1909, 0.0
      %v2038 = vmax.f32 %v1910, 0.0
      %v2039 = vmax.f32 %v1911, 0.0
      %v2040 = vmax.f32 %v1912, 0.0
      %v2041 = vmax.f32 %v1913, 0.0
      %v2042 = vmax.f32 %v1914, 0.0
      %v2043 = vmax.f32 %v1915, 0.0
      %v2044 = vmax.f32 %v1916, 0.0
      %v2045 = vmax.f32 %v1917, 0.0
      %v2046 = vmax.f32 %v1918, 0.0
      %v2047 = vmax.f32 %v1919, 0.0
      %v2048 = vmax.f32 %v1920, 0.0
      %v2049 = vmax.f32 %v1921, 0.0
      %v2050 = vmax.f32 %v1922, 0.0
      %v2051 = vmax.f32 %v1923, 0.0
      %v2052 = vmax.f32 %v1924, 0.0
      %v2053 = vmax.f32 %v1925, 0.0
      %v2054 = vmax.f32 %v1926, 0.0
      %v2055 = vmax.f32 %v1927, 0.0
      %v2056 = vmax.f32 %v1928, 0.0
      %v2057 = vmax.f32 %v1929, 0.0
      %v2058 = vmax.f32 %v1930, 0.0
      %v2059 = vmax.f32 %v1931, 0.0
      %v2060 = vmax.f32 %v1932, 0.0
      %v2061 = vmax.f32 %v1933, 0.0
      %v2062 = vmax.f32 %v1934, 0.0
      %v2063 = vmax.f32 %v1935, 0.0
      %v2064 = vmax.f32 %v1936, 0.0
      %v2065 = vmax.f32 %v1937, 0.0
      %v2066 = vmax.f32 %v1938, 0.0
      %v2067 = vmax.f32 %v1939, 0.0
      %v2068 = vmax.f32 %v1940, 0.0
      %v2069 = vmax.f32 %v1941, 0.0
      %v2070 = vmax.f32 %v1942, 0.0
      %v2071 = vmax.f32 %v1943, 0.0
      %v2072 = vmax.f32 %v1944, 0.0
      %v2073 = vmax.f32 %v1945, 0.0
      %v2074 = vmax.f32 %v1946, 0.0
      %v2075 = vmax.f32 %v1947, 0.0
      %v2076 = vmax.f32 %v1948, 0.0
      %v2077 = vmax.f32 %v1949, 0.0
      %v2078 = vmax.f32 %v1950, 0.0
      %v2079 = vmax.f32 %v1951, 0.0
      %v2080 = vmax.f32 %v1952, 0.0
      %v2081 = vmax.f32 %v1953, 0.0
      %v2082 = vmax.f32 %v1954, 0.0
      %v2083 = vmax.f32 %v1955, 0.0
      %v2084 = vmax.f32 %v1956, 0.0
      %v2085 = vmax.f32 %v1957, 0.0
      %v2086 = vmax.f32 %v1958, 0.0
      %v2087 = vmax.f32 %v1959, 0.0
      %v2088 = vmax.f32 %v1960, 0.0
      %v2089 = vmax.f32 %v1961, 0.0
      %v2090 = vmax.f32 %v1962, 0.0
      %v2091 = vmax.f32 %v1963, 0.0
      %v2092 = vmax.f32 %v1964, 0.0
      %v2093 = vmax.f32 %v1965, 0.0
      %v2094 = vmax.f32 %v1966, 0.0
      %v2095 = vmax.f32 %v1967, 0.0
      %v2096 = vmax.f32 %v1968, 0.0
      %v2097 = vmax.f32 %v1969, 0.0
      %v2098 = vmax.f32 %v1970, 0.0
      %v2099 = vmax.f32 %v1971, 0.0
      %v2100 = vmax.f32 %v1972, 0.0
      %v2101 = vmax.f32 %v1973, 0.0
      %v2102 = vmax.f32 %v1974, 0.0
      %v2103 = vmax.f32 %v1975, 0.0
      %v2104 = vmax.f32 %v1976, 0.0
      %v2105 = vmax.f32 %v1977, 0.0
      %v2106 = vmax.f32 %v1978, 0.0
      %v2107 = vmax.f32 %v1979, 0.0
      %v2108 = vmax.f32 %v1980, 0.0
      %v2109 = vmax.f32 %v1981, 0.0
      %v2110 = vmax.f32 %v1982, 0.0
      %v2111 = vmax.f32 %v1983, 0.0
      %v2112 = vmax.f32 %v1984, 0.0
      %v2113 = vmax.f32 %v1985, 0.0
      %v2114 = vmax.f32 %v1986, 0.0
      %v2115 = vmax.f32 %v1987, 0.0
      %v2116 = vmax.f32 %v1988, 0.0
      %v2117 = vmax.f32 %v1989, 0.0
      %v2118 = vmax.f32 %v1990, 0.0
      %v2119 = vmax.f32 %v1991, 0.0
      %v2120 = vmax.f32 %v1992, 0.0
      %v2121 = vmax.f32 %v1993, 0.0
      %v2122 = vmax.f32 %v1994, 0.0
      %v2123 = vmax.f32 %v1995, 0.0
      %v2124 = vmax.f32 %v1996, 0.0
      %v2125 = vmax.f32 %v1997, 0.0
      %v2126 = vmax.f32 %v1998, 0.0
      %v2127 = vmax.f32 %v1999, 0.0
      %vm2128 = vcmask 130048
      %2129 = vst.msk [vmem:[%s202] sm:$0xff] %vm2128, %v2000
      %2130 = vst.msk [vmem:[%s202 + $0x8] sm:$0xff] %vm2128, %v2001
      %2131 = vst.msk [vmem:[%s202 + $0x10] sm:$0xff] %vm2128, %v2002
      %2132 = vst.msk [vmem:[%s202 + $0x18] sm:$0xff] %vm2128, %v2003
      %2133 = vst.msk [vmem:[%s202 + $0x20] sm:$0xff] %vm2128, %v2004
      %2134 = vst.msk [vmem:[%s202 + $0x28] sm:$0xff] %vm2128, %v2005
      %2135 = vst.msk [vmem:[%s202 + $0x30] sm:$0xff] %vm2128, %v2006
      %2136 = vst.msk [vmem:[%s202 + $0x38] sm:$0xff] %vm2128, %v2007
      %2137 = vst.msk [vmem:[%s202 + $0x40] sm:$0xff] %vm2128, %v2008
      %2138 = vst.msk [vmem:[%s202 + $0x48] sm:$0xff] %vm2128, %v2009
      %2139 = vst.msk [vmem:[%s202 + $0x50] sm:$0xff] %vm2128, %v2010
      %2140 = vst.msk [vmem:[%s202 + $0x58] sm:$0xff] %vm2128, %v2011
      %2141 = vst.msk [vmem:[%s202 + $0x60] sm:$0xff] %vm2128, %v2012
      %2142 = vst.msk [vmem:[%s202 + $0x68] sm:$0xff] %vm2128, %v2013
      %2143 = vst.msk [vmem:[%s202 + $0x70] sm:$0xff] %vm2128, %v2014
      %2144 = vst.msk [vmem:[%s202 + $0x78] sm:$0xff] %vm2128, %v2015
      %2145 = vst.msk [vmem:[%s202 + $0x80] sm:$0xff] %vm2128, %v2016
      %2146 = vst.msk [vmem:[%s202 + $0x88] sm:$0xff] %vm2128, %v2017
      %2147 = vst.msk [vmem:[%s202 + $0x90] sm:$0xff] %vm2128, %v2018
      %2148 = vst.msk [vmem:[%s202 + $0x98] sm:$0xff] %vm2128, %v2019
      %2149 = vst.msk [vmem:[%s202 + $0xa0] sm:$0xff] %vm2128, %v2020
      %2150 = vst.msk [vmem:[%s202 + $0xa8] sm:$0xff] %vm2128, %v2021
      %2151 = vst.msk [vmem:[%s202 + $0xb0] sm:$0xff] %vm2128, %v2022
      %2152 = vst.msk [vmem:[%s202 + $0xb8] sm:$0xff] %vm2128, %v2023
      %2153 = vst.msk [vmem:[%s202 + $0xc0] sm:$0xff] %vm2128, %v2024
      %2154 = vst.msk [vmem:[%s202 + $0xc8] sm:$0xff] %vm2128, %v2025
      %2155 = vst.msk [vmem:[%s202 + $0xd0] sm:$0xff] %vm2128, %v2026
      %2156 = vst.msk [vmem:[%s202 + $0xd8] sm:$0xff] %vm2128, %v2027
      %2157 = vst.msk [vmem:[%s202 + $0xe0] sm:$0xff] %vm2128, %v2028
      %2158 = vst.msk [vmem:[%s202 + $0xe8] sm:$0xff] %vm2128, %v2029
      %2159 = vst.msk [vmem:[%s202 + $0xf0] sm:$0xff] %vm2128, %v2030
      %2160 = vst.msk [vmem:[%s202 + $0xf8] sm:$0xff] %vm2128, %v2031
      %2161 = vst.msk [vmem:[%s202 + $0x100] sm:$0xff] %vm2128, %v2032
      %2162 = vst.msk [vmem:[%s202 + $0x108] sm:$0xff] %vm2128, %v2033
      %2163 = vst.msk [vmem:[%s202 + $0x110] sm:$0xff] %vm2128, %v2034
      %2164 = vst.msk [vmem:[%s202 + $0x118] sm:$0xff] %vm2128, %v2035
      %2165 = vst.msk [vmem:[%s202 + $0x120] sm:$0xff] %vm2128, %v2036
      %2166 = vst.msk [vmem:[%s202 + $0x128] sm:$0xff] %vm2128, %v2037
      %2167 = vst.msk [vmem:[%s202 + $0x130] sm:$0xff] %vm2128, %v2038
      %2168 = vst.msk [vmem:[%s202 + $0x138] sm:$0xff] %vm2128, %v2039
      %2169 = vst.msk [vmem:[%s202 + $0x140] sm:$0xff] %vm2128, %v2040
      %2170 = vst.msk [vmem:[%s202 + $0x148] sm:$0xff] %vm2128, %v2041
      %2171 = vst.msk [vmem:[%s202 + $0x150] sm:$0xff] %vm2128, %v2042
      %2172 = vst.msk [vmem:[%s202 + $0x158] sm:$0xff] %vm2128, %v2043
      %2173 = vst.msk [vmem:[%s202 + $0x160] sm:$0xff] %vm2128, %v2044
      %2174 = vst.msk [vmem:[%s202 + $0x168] sm:$0xff] %vm2128, %v2045
      %2175 = vst.msk [vmem:[%s202 + $0x170] sm:$0xff] %vm2128, %v2046
      %2176 = vst.msk [vmem:[%s202 + $0x178] sm:$0xff] %vm2128, %v2047
      %2177 = vst.msk [vmem:[%s202 + $0x180] sm:$0xff] %vm2128, %v2048
      %2178 = vst.msk [vmem:[%s202 + $0x188] sm:$0xff] %vm2128, %v2049
      %2179 = vst.msk [vmem:[%s202 + $0x190] sm:$0xff] %vm2128, %v2050
      %2180 = vst.msk [vmem:[%s202 + $0x198] sm:$0xff] %vm2128, %v2051
      %2181 = vst.msk [vmem:[%s202 + $0x1a0] sm:$0xff] %vm2128, %v2052
      %2182 = vst.msk [vmem:[%s202 + $0x1a8] sm:$0xff] %vm2128, %v2053
      %2183 = vst.msk [vmem:[%s202 + $0x1b0] sm:$0xff] %vm2128, %v2054
      %2184 = vst.msk [vmem:[%s202 + $0x1b8] sm:$0xff] %vm2128, %v2055
      %2185 = vst.msk [vmem:[%s202 + $0x1c0] sm:$0xff] %vm2128, %v2056
      %2186 = vst.msk [vmem:[%s202 + $0x1c8] sm:$0xff] %vm2128, %v2057
      %2187 = vst.msk [vmem:[%s202 + $0x1d0] sm:$0xff] %vm2128, %v2058
      %2188 = vst.msk [vmem:[%s202 + $0x1d8] sm:$0xff] %vm2128, %v2059
      %2189 = vst.msk [vmem:[%s202 + $0x1e0] sm:$0xff] %vm2128, %v2060
      %2190 = vst.msk [vmem:[%s202 + $0x1e8] sm:$0xff] %vm2128, %v2061
      %2191 = vst.msk [vmem:[%s202 + $0x1f0] sm:$0xff] %vm2128, %v2062
      %2192 = vst.msk [vmem:[%s202 + $0x1f8] sm:$0xff] %vm2128, %v2063
      %2193 = vst.msk [vmem:[%s202 + $0x200] sm:$0xff] %vm2128, %v2064
      %2194 = vst.msk [vmem:[%s202 + $0x208] sm:$0xff] %vm2128, %v2065
      %2195 = vst.msk [vmem:[%s202 + $0x210] sm:$0xff] %vm2128, %v2066
      %2196 = vst.msk [vmem:[%s202 + $0x218] sm:$0xff] %vm2128, %v2067
      %2197 = vst.msk [vmem:[%s202 + $0x220] sm:$0xff] %vm2128, %v2068
      %2198 = vst.msk [vmem:[%s202 + $0x228] sm:$0xff] %vm2128, %v2069
      %2199 = vst.msk [vmem:[%s202 + $0x230] sm:$0xff] %vm2128, %v2070
      %2200 = vst.msk [vmem:[%s202 + $0x238] sm:$0xff] %vm2128, %v2071
      %2201 = vst.msk [vmem:[%s202 + $0x240] sm:$0xff] %vm2128, %v2072
      %2202 = vst.msk [vmem:[%s202 + $0x248] sm:$0xff] %vm2128, %v2073
      %2203 = vst.msk [vmem:[%s202 + $0x250] sm:$0xff] %vm2128, %v2074
      %2204 = vst.msk [vmem:[%s202 + $0x258] sm:$0xff] %vm2128, %v2075
      %2205 = vst.msk [vmem:[%s202 + $0x260] sm:$0xff] %vm2128, %v2076
      %2206 = vst.msk [vmem:[%s202 + $0x268] sm:$0xff] %vm2128, %v2077
      %2207 = vst.msk [vmem:[%s202 + $0x270] sm:$0xff] %vm2128, %v2078
      %2208 = vst.msk [vmem:[%s202 + $0x278] sm:$0xff] %vm2128, %v2079
      %2209 = vst.msk [vmem:[%s202 + $0x280] sm:$0xff] %vm2128, %v2080
      %2210 = vst.msk [vmem:[%s202 + $0x288] sm:$0xff] %vm2128, %v2081
      %2211 = vst.msk [vmem:[%s202 + $0x290] sm:$0xff] %vm2128, %v2082
      %2212 = vst.msk [vmem:[%s202 + $0x298] sm:$0xff] %vm2128, %v2083
      %2213 = vst.msk [vmem:[%s202 + $0x2a0] sm:$0xff] %vm2128, %v2084
      %2214 = vst.msk [vmem:[%s202 + $0x2a8] sm:$0xff] %vm2128, %v2085
      %2215 = vst.msk [vmem:[%s202 + $0x2b0] sm:$0xff] %vm2128, %v2086
      %2216 = vst.msk [vmem:[%s202 + $0x2b8] sm:$0xff] %vm2128, %v2087
      %2217 = vst.msk [vmem:[%s202 + $0x2c0] sm:$0xff] %vm2128, %v2088
      %2218 = vst.msk [vmem:[%s202 + $0x2c8] sm:$0xff] %vm2128, %v2089
      %2219 = vst.msk [vmem:[%s202 + $0x2d0] sm:$0xff] %vm2128, %v2090
      %2220 = vst.msk [vmem:[%s202 + $0x2d8] sm:$0xff] %vm2128, %v2091
      %2221 = vst.msk [vmem:[%s202 + $0x2e0] sm:$0xff] %vm2128, %v2092
      %2222 = vst.msk [vmem:[%s202 + $0x2e8] sm:$0xff] %vm2128, %v2093
      %2223 = vst.msk [vmem:[%s202 + $0x2f0] sm:$0xff] %vm2128, %v2094
      %2224 = vst.msk [vmem:[%s202 + $0x2f8] sm:$0xff] %vm2128, %v2095
      %2225 = vst.msk [vmem:[%s202 + $0x300] sm:$0xff] %vm2128, %v2096
      %2226 = vst.msk [vmem:[%s202 + $0x308] sm:$0xff] %vm2128, %v2097
      %2227 = vst.msk [vmem:[%s202 + $0x310] sm:$0xff] %vm2128, %v2098
      %2228 = vst.msk [vmem:[%s202 + $0x318] sm:$0xff] %vm2128, %v2099
      %2229 = vst.msk [vmem:[%s202 + $0x320] sm:$0xff] %vm2128, %v2100
      %2230 = vst.msk [vmem:[%s202 + $0x328] sm:$0xff] %vm2128, %v2101
      %2231 = vst.msk [vmem:[%s202 + $0x330] sm:$0xff] %vm2128, %v2102
      %2232 = vst.msk [vmem:[%s202 + $0x338] sm:$0xff] %vm2128, %v2103
      %2233 = vst.msk [vmem:[%s202 + $0x340] sm:$0xff] %vm2128, %v2104
      %2234 = vst.msk [vmem:[%s202 + $0x348] sm:$0xff] %vm2128, %v2105
      %2235 = vst.msk [vmem:[%s202 + $0x350] sm:$0xff] %vm2128, %v2106
      %2236 = vst.msk [vmem:[%s202 + $0x358] sm:$0xff] %vm2128, %v2107
      %2237 = vst.msk [vmem:[%s202 + $0x360] sm:$0xff] %vm2128, %v2108
      %2238 = vst.msk [vmem:[%s202 + $0x368] sm:$0xff] %vm2128, %v2109
      %2239 = vst.msk [vmem:[%s202 + $0x370] sm:$0xff] %vm2128, %v2110
      %2240 = vst.msk [vmem:[%s202 + $0x378] sm:$0xff] %vm2128, %v2111
      %2241 = vst.msk [vmem:[%s202 + $0x380] sm:$0xff] %vm2128, %v2112
      %2242 = vst.msk [vmem:[%s202 + $0x388] sm:$0xff] %vm2128, %v2113
      %2243 = vst.msk [vmem:[%s202 + $0x390] sm:$0xff] %vm2128, %v2114
      %2244 = vst.msk [vmem:[%s202 + $0x398] sm:$0xff] %vm2128, %v2115
      %2245 = vst.msk [vmem:[%s202 + $0x3a0] sm:$0xff] %vm2128, %v2116
      %2246 = vst.msk [vmem:[%s202 + $0x3a8] sm:$0xff] %vm2128, %v2117
      %2247 = vst.msk [vmem:[%s202 + $0x3b0] sm:$0xff] %vm2128, %v2118
      %2248 = vst.msk [vmem:[%s202 + $0x3b8] sm:$0xff] %vm2128, %v2119
      %2249 = vst.msk [vmem:[%s202 + $0x3c0] sm:$0xff] %vm2128, %v2120
      %2250 = vst.msk [vmem:[%s202 + $0x3c8] sm:$0xff] %vm2128, %v2121
      %2251 = vst.msk [vmem:[%s202 + $0x3d0] sm:$0xff] %vm2128, %v2122
      %2252 = vst.msk [vmem:[%s202 + $0x3d8] sm:$0xff] %vm2128, %v2123
      %2253 = vst.msk [vmem:[%s202 + $0x3e0] sm:$0xff] %vm2128, %v2124
      %2254 = vst.msk [vmem:[%s202 + $0x3e8] sm:$0xff] %vm2128, %v2125
      %2255 = vst.msk [vmem:[%s202 + $0x3f0] sm:$0xff] %vm2128, %v2126
      %2256 = vst.msk [vmem:[%s202 + $0x3f8] sm:$0xff] %vm2128, %v2127
      %s2257 = smul.u32 128, %s15
      %p2258 = scmp.lt.s32.totalorder %s2257, 255
      %s2259 = scalar_select %p2258, %s2257, 255
      %s2260 = smul.addr %s2259, 8
      %s2261 = scalar_lea.vmem %s4, %s2260
      // Predicated region
      $region37: #{tpu_custom_call.1} parent=35 // pred_check
        %p2262 = pneg %p122
      $region38: #{tpu_custom_call.1} parent=35 // pred_check_branch
        %2264 = sbr.rel (%p2262) target = $region40
      $region39: #{tpu_custom_call.1} parent=35 // pred_region
        %s2265 = smul.u32 128, %s15
      $region40: #{tpu_custom_call.1} parent=35 // pred_fallthru
        _
    $region36: #{tpu_custom_call.1} parent=5 // pred_fallthru
      _
    %p2266 = scmp.le.s32.totalorder 2, %s10
    // Predicated region
    $region41: #{tpu_custom_call.1} parent=5 // pred_check
      %p2267 = pneg %p2266
    $region42: #{tpu_custom_call.1} parent=5 // pred_check_branch
      %2269 = sbr.rel (%p2267) target = $region44
    $region43: #{tpu_custom_call.1} parent=5 // pred_region
      %s2270 = ssub.s32 %s10, 2
      // Predicated region
      $region45: #{tpu_custom_call.1} parent=43 // pred_check
        %p2271 = pneg %p128
      $region46: #{tpu_custom_call.1} parent=43 // pred_check_branch
        %2273 = sbr.rel (%p2271) target = $region48
      $region47: #{tpu_custom_call.1} parent=43 // pred_region
        %s2274 = smul.u32 128, %s16
        %p2275 = scmp.lt.s32.totalorder %s2274, 255
        %s2276 = scalar_select %p2275, %s2274, 255
        %s2277 = smul.addr %s2276, 8
        %s2278 = scalar_lea.vmem %s4, %s2277
      $region48: #{tpu_custom_call.1} parent=43 // pred_fallthru
        _
    $region44: #{tpu_custom_call.1} parent=5 // pred_fallthru
      _
  $region6: #{tpu_custom_call.1} parent=0 // loop_footer
    %s14 = sadd.s32 1, %s10
  $region7: #{tpu_custom_call.1} parent=0 // loop_footer_branch
    %9 = sbr.rel target = $region3
  $region8: #{tpu_custom_call.1} parent=0 // loop_exit
    _

</llo_original>
